<compile_context>
chip_gen: v6e
topology: v6e:2x2x1
jax: 0.10.0
libtpu: 0.0.40
codegen_flags: <defaults>
</compile_context>

<pallas_src>
import jax
import jax.numpy as jnp
from jax import lax
from jax.experimental import pallas as pl
from jax.experimental.pallas import tpu as pltpu


# ----------------------------------------------------------------------------
# Generic tiled matmul + bias kernel (parallel grid over M and N, full K).
# Used for the hoisted input projection and the vocab projection.
# ----------------------------------------------------------------------------
def _matmul_bias_kernel(x_ref, w_ref, b_ref, o_ref):
    acc = jnp.dot(x_ref[...], w_ref[...], preferred_element_type=jnp.float32)
    o_ref[...] = (acc + b_ref[...]).astype(o_ref.dtype)


def _pick_tile(dim, candidates):
    for c in candidates:
        if dim % c == 0:
            return c
    return dim


def matmul_bias(x, w, b, out_dtype=jnp.float32):
    """(M, K) @ (K, N) + b with M/N tiled ('parallel') and full K per tile."""
    M, K = x.shape
    Kw, N = w.shape
    assert K == Kw
    tm = _pick_tile(M, (512, 256, 128, 64, 32, 16, 8))
    tn = _pick_tile(N, (1024, 512, 256, 128))   # tiles V for large vocab (v7x VMEM)
    return pl.pallas_call(
        _matmul_bias_kernel,
        out_shape=jax.ShapeDtypeStruct((M, N), out_dtype),
        grid=(M // tm, N // tn),
        in_specs=[
            pl.BlockSpec((tm, K), lambda i, j: (i, 0)),
            pl.BlockSpec((K, tn), lambda i, j: (0, j)),
            pl.BlockSpec((1, tn), lambda i, j: (0, j)),
        ],
        out_specs=pl.BlockSpec((tm, tn), lambda i, j: (i, j)),
        compiler_params=pltpu.CompilerParams(
            dimension_semantics=("parallel", "parallel")),
    )(x, w, b.reshape(1, N))


# ----------------------------------------------------------------------------
# LSTM recurrence kernel: one time-chunk of Tc steps per grid iteration.
# ----------------------------------------------------------------------------
def _lstm_chunk_kernel(xp_ref, whh_ref, h0_ref, hs_ref, h_ref, c_ref):
    """xp_ref:(Tc,B,4H) f32 precomputed x@W_ih+b; whh_ref:(H,4H); h0_ref:(B,H) f32;
    hs_ref:(Tc,B,H) output hidden states; h_ref/c_ref:(B,H) f32 VMEM carries."""
    H = h_ref.shape[-1]
    Tc = xp_ref.shape[0]

    # Seed the recurrent state on the very first chunk only.
    @pl.when(pl.program_id(0) == 0)
    def _():
        h_ref[...] = h0_ref[...].astype(jnp.float32)
        c_ref[...] = jnp.zeros_like(c_ref)

    def step(i, carry):
        # Recurrent matmul — the only matmul left inside the loop.
        gates = xp_ref[i].astype(jnp.float32) + jnp.dot(
            h_ref[...].astype(whh_ref.dtype), whh_ref[...],
            preferred_element_type=jnp.float32)                  # (B, 4H) f32
        # Gate math kept in f32 (v5e VPU/EUP have no bf16 path). Slices are
        # lane-aligned as long as H % 128 == 0 (asserted in the wrapper).
        i_g = jax.nn.sigmoid(gates[:, 0 * H:1 * H])
        f_g = jax.nn.sigmoid(gates[:, 1 * H:2 * H])
        g_g = jnp.tanh(gates[:, 2 * H:3 * H])
        o_g = jax.nn.sigmoid(gates[:, 3 * H:4 * H])
        c_new = f_g * c_ref[...] + i_g * g_g
        h_new = o_g * jnp.tanh(c_new)
        c_ref[...] = c_new
        h_ref[...] = h_new
        hs_ref[i] = h_new.astype(hs_ref.dtype)
        return carry

    lax.fori_loop(0, Tc, step, 0, unroll=True)


def _build_lstm_recurrence(T, B, H, tc, hs_dtype, single_buffer_consts):
    if single_buffer_consts:
        # Constant-index blocks: their block index never changes across the
        # grid, so double buffering only wastes VMEM (biggest win on v7x).
        const = dict(pipeline_mode=pl.Buffered(1))
    else:
        const = {}
    return pl.pallas_call(
        _lstm_chunk_kernel,
        out_shape=jax.ShapeDtypeStruct((T, B, H), hs_dtype),
        grid=(T // tc,),
        in_specs=[
            pl.BlockSpec((tc, B, 4 * H), lambda t: (t, 0, 0)),   # x projection chunk
            pl.BlockSpec((H, 4 * H), lambda t: (0, 0), **const),  # W_hh (resident)
            pl.BlockSpec((B, H), lambda t: (0, 0), **const),      # h0
        ],
        out_specs=pl.BlockSpec((tc, B, H), lambda t: (t, 0, 0)),
        scratch_shapes=[
            pltpu.VMEM((B, H), jnp.float32),   # h carry
            pltpu.VMEM((B, H), jnp.float32),   # c carry
        ],
        # IMPORTANT: h/c are carried in VMEM scratch across grid steps, so the
        # time-chunk axis MUST stay "arbitrary" (sequential). Marking it
        # "parallel" would silently break the recurrence.
        compiler_params=pltpu.CompilerParams(
            dimension_semantics=("arbitrary",)),
    )


# ----------------------------------------------------------------------------
# Full decoder forward.
# ----------------------------------------------------------------------------
def decoder_forward(z, x_ids, params, *, matmul_dtype=jnp.float32, time_chunk=8):
    """z: (B, latent) f32, x_ids: (B, T) int32 -> logits (B, T, vocab) f32.

    matmul_dtype: dtype of MXU matmul inputs (weights + activations).
      jnp.bfloat16 is recommended on v6e/v7x; accumulation and all gate math
      stay f32 regardless of this setting.
    """
    B, L = z.shape
    T = x_ids.shape[1]
    E = params["emb"].shape[1]
    H = params["W_hh"].shape[0]
    V = params["W_out"].shape[1]

    # Keep lane/sublane alignment so gate slices and output blocks are free.
    assert H % 128 == 0, "hidden_dim must be a multiple of 128"
    assert V % 128 == 0, "vocab_size must be a multiple of 128"
    assert B % 8 == 0, "batch must be a multiple of 8"
    tc = max(1, min(time_chunk, T))
    while T % tc:
        tc -= 1

    # --- plain-JAX glue: tiny one-off ops --------------------------------
    # h0 = tanh(fc(z)) outside the kernel (removes z/W_fc/b_fc residency).
    h0 = jnp.tanh(z.astype(jnp.float32) @ params["W_fc"] + params["b_fc"])
    # Gather embeddings directly time-major: (T, B, E), no activation transpose.
    x_tm = jnp.take(params["emb"], x_ids.T, axis=0)
    # TODO(synk): for small vocab one could instead pre-tabulate emb @ W_ih + b
    # of shape (V, 4H) and make the whole input projection a gather.

    # --- 1) hoisted input projection: one big MXU-friendly matmul --------
    xproj = matmul_bias(
        x_tm.reshape(T * B, E).astype(matmul_dtype),
        params["W_ih"].astype(matmul_dtype),
        params["b_lstm"].astype(jnp.float32),
        out_dtype=jnp.float32,
    ).reshape(T, B, 4 * H)

    # --- 2) sequential LSTM recurrence (h @ W_hh + gates only) -----------
    w_hh = params["W_hh"].astype(matmul_dtype)
    try:
        hs = _build_lstm_recurrence(T, B, H, tc, matmul_dtype, True)(xproj, w_hh, h0)
    except Exception:
        # pl.Buffered(1) (single-buffered constant blocks) unsupported on this
        # jax version: fall back to default double-buffered constant blocks.
        hs = _build_lstm_recurrence(T, B, H, tc, matmul_dtype, False)(xproj, w_hh, h0)

    # --- 3) vocab projection: tiled parallel matmul (full MXU rows) ------
    hs_bm = jnp.transpose(hs, (1, 0, 2)).reshape(B * T, H)   # cheap (B,T,H) reorder
    logits = matmul_bias(
        hs_bm,
        params["W_out"].astype(matmul_dtype),
        params["b_out"].astype(jnp.float32),
        out_dtype=jnp.float32,
    ).reshape(B, T, V)
    return logits


# ----------------------------------------------------------------------------
# Pure-JAX reference matching the PyTorch forward (for validation).
# ----------------------------------------------------------------------------
def decoder_reference(z, x_ids, params):
    H = params["W_hh"].shape[0]
    h = jnp.tanh(z @ params["W_fc"] + params["b_fc"])
    c = jnp.zeros_like(h)
    x_emb = jnp.take(params["emb"], x_ids, axis=0)            # (B, T, E)
    xs = jnp.swapaxes(x_emb, 0, 1)                            # (T, B, E)

    def step(carry, x_t):
        h, c = carry
        gates = x_t @ params["W_ih"] + h @ params["W_hh"] + params["b_lstm"]
        i = jax.nn.sigmoid(gates[:, 0 * H:1 * H])
        f = jax.nn.sigmoid(gates[:, 1 * H:2 * H])
        g = jnp.tanh(gates[:, 2 * H:3 * H])
        o = jax.nn.sigmoid(gates[:, 3 * H:4 * H])
        c = f * c + i * g
        h = o * jnp.tanh(c)
        return (h, c), h

    (_, _), hs = lax.scan(step, (h, c), xs)                   # (T, B, H)
    logits = hs @ params["W_out"] + params["b_out"]           # (T, B, V)
    return jnp.swapaxes(logits, 0, 1)


def init_params(key, vocab_size, emb_dim, hidden_dim, latent_dim):
    ks = jax.random.split(key, 8)
    s = 0.05
    return {
        "W_fc": s * jax.random.normal(ks[0], (latent_dim, hidden_dim), jnp.float32),
        "b_fc": s * jax.random.normal(ks[1], (hidden_dim,), jnp.float32),
        "emb":  s * jax.random.normal(ks[2], (vocab_size, emb_dim), jnp.float32),
        # LSTM weights stored transposed vs PyTorch: (in, 4H); gate order i,f,g,o.
        "W_ih": s * jax.random.normal(ks[3], (emb_dim, 4 * hidden_dim), jnp.float32),
        "W_hh": s * jax.random.normal(ks[4], (hidden_dim, 4 * hidden_dim), jnp.float32),
        # b_lstm = b_ih + b_hh (PyTorch keeps them separate; they only add).
        "b_lstm": s * jax.random.normal(ks[5], (4 * hidden_dim,), jnp.float32),
        "W_out": s * jax.random.normal(ks[6], (hidden_dim, vocab_size), jnp.float32),
        "b_out": s * jax.random.normal(ks[7], (vocab_size,), jnp.float32),
    }


if __name__ == "__main__":
    # Small shapes consistent with the module (emb_dim=64; hidden/latent/vocab
    # scaled down but kept lane-aligned: H % 128 == 0, V % 128 == 0, B % 8 == 0).
    B, T = 8, 32
    vocab_size, emb_dim, hidden_dim, latent_dim = 512, 64, 256, 64

    key = jax.random.PRNGKey(0)
    kp, kz, kx = jax.random.split(key, 3)
    params = init_params(kp, vocab_size, emb_dim, hidden_dim, latent_dim)

    z = jax.random.normal(kz, (B, latent_dim), jnp.float32)
    x_ids = jax.random.randint(kx, (B, T), 0, vocab_size, jnp.int32)

    ref = decoder_reference(z, x_ids, params)

    # f32 matmul inputs: faithful config, tight check.
    logits = decoder_forward(z, x_ids, params, matmul_dtype=jnp.float32)
    jax.block_until_ready(logits)
    assert logits.shape == (B, T, vocab_size)
    assert jnp.allclose(logits, ref, atol=1e-3, rtol=1e-3), "f32 mismatch vs reference"

    # bf16 matmul inputs (recommended on v6e/v7x): f32 accumulation + f32 gate
    # math are retained, so only matmul-input rounding differs -> loose check.
    logits_bf16 = decoder_forward(z, x_ids, params, matmul_dtype=jnp.bfloat16)
    jax.block_until_ready(logits_bf16)
    assert bool(jnp.all(jnp.isfinite(logits_bf16)))
    assert jnp.allclose(logits_bf16, ref, atol=5e-2, rtol=5e-2), "bf16 mismatch vs reference"

    print("KERNEL_OK")
</pallas_src>

<mosaic_0001>
module attributes {stable_mosaic.version = 11 : i64} {
  func.func @_matmul_bias_kernel(%arg0: i32, %arg1: i32, %arg2: memref<256x64xf32, #tpu.memory_space<vmem>>, %arg3: memref<64x1024xf32, #tpu.memory_space<vmem>>, %arg4: memref<1x1024xf32, #tpu.memory_space<vmem>>, %arg5: memref<256x1024xf32, #tpu.memory_space<vmem>>) attributes {dimension_semantics = [#tpu.dimension_semantics<parallel>, #tpu.dimension_semantics<parallel>], iteration_bounds = array<i64: 1, 1>, scalar_prefetch = 0 : i64, scratch_operands = 0 : i64, tpu.core_type = #tpu.core_type<tc>, window_params = [{transform_indices = @transform_0, window_bounds = array<i64: 256, 64>}, {transform_indices = @transform_1, window_bounds = array<i64: 64, 1024>}, {transform_indices = @transform_2, window_bounds = array<i64: 1, 1024>}, {transform_indices = @transform_3, window_bounds = array<i64: 256, 1024>}]} {
    %c0 = arith.constant 0 : index
    %c0_0 = arith.constant 0 : index
    %0 = vector.load %arg2[%c0, %c0_0] : memref<256x64xf32, #tpu.memory_space<vmem>>, vector<256x64xf32>
    %c0_1 = arith.constant 0 : index
    %c0_2 = arith.constant 0 : index
    %1 = vector.load %arg3[%c0_1, %c0_2] : memref<64x1024xf32, #tpu.memory_space<vmem>>, vector<64x1024xf32>
    %cst = arith.constant dense<0.000000e+00> : vector<256x1024xf32>
    %2 = tpu.matmul %0, %1, %cst {dimension_numbers = #tpu.dot_dimension_numbers<[1], [0], [0], [1], [0, 0, 1, 1], [], []>} : vector<256x64xf32>, vector<64x1024xf32>, vector<256x1024xf32> -> vector<256x1024xf32>
    %c0_3 = arith.constant 0 : index
    %c0_4 = arith.constant 0 : index
    %3 = vector.load %arg4[%c0_3, %c0_4] : memref<1x1024xf32, #tpu.memory_space<vmem>>, vector<1x1024xf32>
    %4 = vector.broadcast %3 : vector<1x1024xf32> to vector<256x1024xf32>
    %5 = arith.addf %2, %4 : vector<256x1024xf32>
    %c0_5 = arith.constant 0 : index
    %c0_6 = arith.constant 0 : index
    %6 = vector.load %arg5[%c0_5, %c0_6] : memref<256x1024xf32, #tpu.memory_space<vmem>>, vector<256x1024xf32>
    tpu.vector_store %arg5[%c0_5, %c0_6], %5 {strides = array<i32>} : memref<256x1024xf32, #tpu.memory_space<vmem>>, vector<256x1024xf32>,
    return
  }
  func.func @transform_0(%arg0: i32, %arg1: i32) -> (i32, i32) {
    %c0_i32 = arith.constant 0 : i32
    %c0_i32_0 = arith.constant 0 : i32
    return %arg0, %c0_i32 : i32, i32
  }
  func.func @transform_1(%arg0: i32, %arg1: i32) -> (i32, i32) {
    %c0_i32 = arith.constant 0 : i32
    %c0_i32_0 = arith.constant 0 : i32
    return %c0_i32, %arg1 : i32, i32
  }
  func.func @transform_2(%arg0: i32, %arg1: i32) -> (i32, i32) {
    %c0_i32 = arith.constant 0 : i32
    %c0_i32_0 = arith.constant 0 : i32
    return %c0_i32, %arg1 : i32, i32
  }
  func.func @transform_3(%arg0: i32, %arg1: i32) -> (i32, i32) {
    %c0_i32 = arith.constant 0 : i32
    return %arg0, %arg1 : i32, i32
  }
}

</mosaic_0001>

<llo_original>
// kernel: tpu_custom_call.1
$region0: #{tpu_custom_call.1}
  #allocation0 [shape = 'u32[]', space=smem, size = 0x4, offset = 0x4, fixed_abs, tag = 'smem constant byte address 0x4 - core index']
  #allocation1 [shape = 'u32[144,128]{1,0:T(1,128)}', space=vmem, size = 0x12000, scoped, tag = 'internal scratch']
  %s0 = inlined_call_operand.vmem [shape: f32[256,64], index: 0, kind: input, shape index: {}]
  %s1 = inlined_call_operand.hbm [shape: f32[64,1024], index: 1, kind: input, shape index: {}]
  %s2 = inlined_call_operand.vmem [shape: f32[1,1024], index: 2, kind: input, shape index: {}]
  %s3 = inlined_call_operand.hbm [shape: f32[256,1024], index: 3, kind: output, shape index: {}]
  %s4 = sld [smem:[#allocation0]]
  $region26: #{tpu_custom_call.1} parent=0
    _
  %s6 = ssub.s32 1, %s4
  %s7 = scalar_select 0, %s6, %s4
  $region1: #{tpu_custom_call.1} parent=0
    #allocation2 [shape = 'u8[262144]{0}', space=vmem, size = 0x40000, scoped, tag = 'input window, operand 1, single buffered']
    #allocation3 [shape = 's32[1]{0}', space=sflag, size = 0x4, scoped, tag = 'scoped memory for tpu_custom_call.1']
    #allocation4 [shape = 's32[1]{0}', space=sflag, size = 0x4, scoped, tag = 'scoped memory for tpu_custom_call.1']
    #allocation5 [shape = 'u8[1048576]{0}', space=vmem, size = 0x100000, scoped, tag = 'output window, operand 0, single buffered']
    %8 = vsyncpa [#allocation3], 0
    %9 = vsyncpa [#allocation4], 0
    // Predicated region
    $region2: #{tpu_custom_call.1} parent=1 // pred_check
      _
    $region3: #{tpu_custom_call.1} parent=1 // pred_check_branch
      %11 = sbr.rel (0) target = $region5
    $region4: #{tpu_custom_call.1} parent=1 // pred_region
      _
    $region5: #{tpu_custom_call.1} parent=1 // pred_fallthru
      _
    // Predicated region
    $region6: #{tpu_custom_call.1} parent=1 // pred_check
      _
    $region7: #{tpu_custom_call.1} parent=1 // pred_check_branch
      %13 = sbr.rel (0) target = $region9
    $region8: #{tpu_custom_call.1} parent=1 // pred_region
      %s15 = ssub.s32 8192, 8192
      %16 = vsyncadd [#allocation3], %s15
      %s17 = sshll.u32 [#allocation2], 4
      %s18 = int_to_ptr.vmem [resolvable:$true] %s17
      %23 = dma.hbm_to_vmem [thread:$0]  %s1, 8192, %s18, [#allocation3], 1024, 1024, 64
    $region9: #{tpu_custom_call.1} parent=1 // pred_fallthru
      _
    // Predicated region
    $region10: #{tpu_custom_call.1} parent=1 // pred_check
      _
    $region11: #{tpu_custom_call.1} parent=1 // pred_check_branch
      %25 = sbr.rel (0) target = $region13
    $region12: #{tpu_custom_call.1} parent=1 // pred_region
      _
    $region13: #{tpu_custom_call.1} parent=1 // pred_fallthru
      _
    // Predicated region
    $region14: #{tpu_custom_call.1} parent=1 // pred_check
      _
    $region15: #{tpu_custom_call.1} parent=1 // pred_check_branch
      %27 = sbr.rel (0) target = $region17
    $region16: #{tpu_custom_call.1} parent=1 // pred_region
      %28 = dma.done [#allocation3], 8192
    $region17: #{tpu_custom_call.1} parent=1 // pred_fallthru
      _
    %v29 = vld [vmem:[%s0] sm:$0xff]
    %v30 = vld [vmem:[%s0 + $0x8] sm:$0xff]
    %v31 = vld [vmem:[%s0 + $0x10] sm:$0xff]
    %v32 = vld [vmem:[%s0 + $0x18] sm:$0xff]
    %v33 = vld [vmem:[%s0 + $0x20] sm:$0xff]
    %v34 = vld [vmem:[%s0 + $0x28] sm:$0xff]
    %v35 = vld [vmem:[%s0 + $0x30] sm:$0xff]
    %v36 = vld [vmem:[%s0 + $0x38] sm:$0xff]
    %v37 = vld [vmem:[%s0 + $0x40] sm:$0xff]
    %v38 = vld [vmem:[%s0 + $0x48] sm:$0xff]
    %v39 = vld [vmem:[%s0 + $0x50] sm:$0xff]
    %v40 = vld [vmem:[%s0 + $0x58] sm:$0xff]
    %v41 = vld [vmem:[%s0 + $0x60] sm:$0xff]
    %v42 = vld [vmem:[%s0 + $0x68] sm:$0xff]
    %v43 = vld [vmem:[%s0 + $0x70] sm:$0xff]
    %v44 = vld [vmem:[%s0 + $0x78] sm:$0xff]
    %v45 = vld [vmem:[%s0 + $0x80] sm:$0xff]
    %v46 = vld [vmem:[%s0 + $0x88] sm:$0xff]
    %v47 = vld [vmem:[%s0 + $0x90] sm:$0xff]
    %v48 = vld [vmem:[%s0 + $0x98] sm:$0xff]
    %v49 = vld [vmem:[%s0 + $0xa0] sm:$0xff]
    %v50 = vld [vmem:[%s0 + $0xa8] sm:$0xff]
    %v51 = vld [vmem:[%s0 + $0xb0] sm:$0xff]
    %v52 = vld [vmem:[%s0 + $0xb8] sm:$0xff]
    %v53 = vld [vmem:[%s0 + $0xc0] sm:$0xff]
    %v54 = vld [vmem:[%s0 + $0xc8] sm:$0xff]
    %v55 = vld [vmem:[%s0 + $0xd0] sm:$0xff]
    %v56 = vld [vmem:[%s0 + $0xd8] sm:$0xff]
    %v57 = vld [vmem:[%s0 + $0xe0] sm:$0xff]
    %v58 = vld [vmem:[%s0 + $0xe8] sm:$0xff]
    %v59 = vld [vmem:[%s0 + $0xf0] sm:$0xff]
    %v60 = vld [vmem:[%s0 + $0xf8] sm:$0xff]
    %v61 = vld [vmem:[#allocation2] sm:$0xff]
    %v62 = vld [vmem:[#allocation2 + $0x8] sm:$0xff]
    %v63 = vld [vmem:[#allocation2 + $0x10] sm:$0xff]
    %v64 = vld [vmem:[#allocation2 + $0x18] sm:$0xff]
    %v65 = vld [vmem:[#allocation2 + $0x20] sm:$0xff]
    %v66 = vld [vmem:[#allocation2 + $0x28] sm:$0xff]
    %v67 = vld [vmem:[#allocation2 + $0x30] sm:$0xff]
    %v68 = vld [vmem:[#allocation2 + $0x38] sm:$0xff]
    %v69 = vld [vmem:[#allocation2 + $0x40] sm:$0xff]
    %v70 = vld [vmem:[#allocation2 + $0x48] sm:$0xff]
    %v71 = vld [vmem:[#allocation2 + $0x50] sm:$0xff]
    %v72 = vld [vmem:[#allocation2 + $0x58] sm:$0xff]
    %v73 = vld [vmem:[#allocation2 + $0x60] sm:$0xff]
    %v74 = vld [vmem:[#allocation2 + $0x68] sm:$0xff]
    %v75 = vld [vmem:[#allocation2 + $0x70] sm:$0xff]
    %v76 = vld [vmem:[#allocation2 + $0x78] sm:$0xff]
    %v77 = vld [vmem:[#allocation2 + $0x80] sm:$0xff]
    %v78 = vld [vmem:[#allocation2 + $0x88] sm:$0xff]
    %v79 = vld [vmem:[#allocation2 + $0x90] sm:$0xff]
    %v80 = vld [vmem:[#allocation2 + $0x98] sm:$0xff]
    %v81 = vld [vmem:[#allocation2 + $0xa0] sm:$0xff]
    %v82 = vld [vmem:[#allocation2 + $0xa8] sm:$0xff]
    %v83 = vld [vmem:[#allocation2 + $0xb0] sm:$0xff]
    %v84 = vld [vmem:[#allocation2 + $0xb8] sm:$0xff]
    %v85 = vld [vmem:[#allocation2 + $0xc0] sm:$0xff]
    %v86 = vld [vmem:[#allocation2 + $0xc8] sm:$0xff]
    %v87 = vld [vmem:[#allocation2 + $0xd0] sm:$0xff]
    %v88 = vld [vmem:[#allocation2 + $0xd8] sm:$0xff]
    %v89 = vld [vmem:[#allocation2 + $0xe0] sm:$0xff]
    %v90 = vld [vmem:[#allocation2 + $0xe8] sm:$0xff]
    %v91 = vld [vmem:[#allocation2 + $0xf0] sm:$0xff]
    %v92 = vld [vmem:[#allocation2 + $0xf8] sm:$0xff]
    %v93 = vld [vmem:[#allocation2 + $0x100] sm:$0xff]
    %v94 = vld [vmem:[#allocation2 + $0x108] sm:$0xff]
    %v95 = vld [vmem:[#allocation2 + $0x110] sm:$0xff]
    %v96 = vld [vmem:[#allocation2 + $0x118] sm:$0xff]
    %v97 = vld [vmem:[#allocation2 + $0x120] sm:$0xff]
    %v98 = vld [vmem:[#allocation2 + $0x128] sm:$0xff]
    %v99 = vld [vmem:[#allocation2 + $0x130] sm:$0xff]
    %v100 = vld [vmem:[#allocation2 + $0x138] sm:$0xff]
    %v101 = vld [vmem:[#allocation2 + $0x140] sm:$0xff]
    %v102 = vld [vmem:[#allocation2 + $0x148] sm:$0xff]
    %v103 = vld [vmem:[#allocation2 + $0x150] sm:$0xff]
    %v104 = vld [vmem:[#allocation2 + $0x158] sm:$0xff]
    %v105 = vld [vmem:[#allocation2 + $0x160] sm:$0xff]
    %v106 = vld [vmem:[#allocation2 + $0x168] sm:$0xff]
    %v107 = vld [vmem:[#allocation2 + $0x170] sm:$0xff]
    %v108 = vld [vmem:[#allocation2 + $0x178] sm:$0xff]
    %v109 = vld [vmem:[#allocation2 + $0x180] sm:$0xff]
    %v110 = vld [vmem:[#allocation2 + $0x188] sm:$0xff]
    %v111 = vld [vmem:[#allocation2 + $0x190] sm:$0xff]
    %v112 = vld [vmem:[#allocation2 + $0x198] sm:$0xff]
    %v113 = vld [vmem:[#allocation2 + $0x1a0] sm:$0xff]
    %v114 = vld [vmem:[#allocation2 + $0x1a8] sm:$0xff]
    %v115 = vld [vmem:[#allocation2 + $0x1b0] sm:$0xff]
    %v116 = vld [vmem:[#allocation2 + $0x1b8] sm:$0xff]
    %v117 = vld [vmem:[#allocation2 + $0x1c0] sm:$0xff]
    %v118 = vld [vmem:[#allocation2 + $0x1c8] sm:$0xff]
    %v119 = vld [vmem:[#allocation2 + $0x1d0] sm:$0xff]
    %v120 = vld [vmem:[#allocation2 + $0x1d8] sm:$0xff]
    %v121 = vld [vmem:[#allocation2 + $0x1e0] sm:$0xff]
    %v122 = vld [vmem:[#allocation2 + $0x1e8] sm:$0xff]
    %v123 = vld [vmem:[#allocation2 + $0x1f0] sm:$0xff]
    %v124 = vld [vmem:[#allocation2 + $0x1f8] sm:$0xff]
    %v125 = vld [vmem:[%s2] sm:$0xff]
    %v127 = vlaneseq
    %v128 = vshrl.u32 %v127, 7
    %v129 = vsub.s32 0, %v128
    %v130 = vrot.slane %v125, %v129
    %v131 = vlaneseq
    %v132 = vshrl.u32 %v131, 7
    %v133 = vsub.s32 1, %v132
    %v134 = vrot.slane %v125, %v133
    %v135 = vlaneseq
    %v136 = vshrl.u32 %v135, 7
    %v137 = vsub.s32 2, %v136
    %v138 = vrot.slane %v125, %v137
    %v139 = vlaneseq
    %v140 = vshrl.u32 %v139, 7
    %v141 = vsub.s32 3, %v140
    %v142 = vrot.slane %v125, %v141
    %v143 = vlaneseq
    %v144 = vshrl.u32 %v143, 7
    %v145 = vsub.s32 4, %v144
    %v146 = vrot.slane %v125, %v145
    %v147 = vlaneseq
    %v148 = vshrl.u32 %v147, 7
    %v149 = vsub.s32 5, %v148
    %v150 = vrot.slane %v125, %v149
    %v151 = vlaneseq
    %v152 = vshrl.u32 %v151, 7
    %v153 = vsub.s32 6, %v152
    %v154 = vrot.slane %v125, %v153
    %v155 = vlaneseq
    %v156 = vshrl.u32 %v155, 7
    %v157 = vsub.s32 7, %v156
    %v158 = vrot.slane %v125, %v157
    %vm167 = vcmask 523264
    %v169 = vsel %vm167, %v29, 0
    %v172 = vsel %vm167, %v30, 0
    %v175 = vsel %vm167, %v31, 0
    %v178 = vsel %vm167, %v32, 0
    %v181 = vsel %vm167, %v33, 0
    %v184 = vsel %vm167, %v34, 0
    %v187 = vsel %vm167, %v35, 0
    %v190 = vsel %vm167, %v36, 0
    %v193 = vsel %vm167, %v37, 0
    %v196 = vsel %vm167, %v38, 0
    %v199 = vsel %vm167, %v39, 0
    %v202 = vsel %vm167, %v40, 0
    %v205 = vsel %vm167, %v41, 0
    %v208 = vsel %vm167, %v42, 0
    %v211 = vsel %vm167, %v43, 0
    %v214 = vsel %vm167, %v44, 0
    %v217 = vsel %vm167, %v45, 0
    %v220 = vsel %vm167, %v46, 0
    %v223 = vsel %vm167, %v47, 0
    %v226 = vsel %vm167, %v48, 0
    %v229 = vsel %vm167, %v49, 0
    %v232 = vsel %vm167, %v50, 0
    %v235 = vsel %vm167, %v51, 0
    %v238 = vsel %vm167, %v52, 0
    %v241 = vsel %vm167, %v53, 0
    %v244 = vsel %vm167, %v54, 0
    %v247 = vsel %vm167, %v55, 0
    %v250 = vsel %vm167, %v56, 0
    %v253 = vsel %vm167, %v57, 0
    %v256 = vsel %vm167, %v58, 0
    %v259 = vsel %vm167, %v59, 0
    %v262 = vsel %vm167, %v60, 0
    %264 = vmatprep.subr.mxu0 0.0
    %265 = vmatpush1.msra.mxu0 0.0
    %266 = vmatprep.subr.mxu0 0.0
    %267 = vmatpush1.msra.mxu0 0.0
    %268 = vmatprep.subr.mxu0 0.0
    %269 = vmatpush1.msra.mxu0 0.0
    %270 = vmatprep.subr.mxu0 0.0
    %271 = vmatpush1.msra.mxu0 0.0
    %272 = vmatprep.subr.mxu0 0.0
    %273 = vmatpush1.msra.mxu0 0.0
    %274 = vmatprep.subr.mxu0 0.0
    %275 = vmatpush1.msra.mxu0 0.0
    %276 = vmatprep.subr.mxu0 0.0
    %277 = vmatpush1.msra.mxu0 0.0
    %278 = vmatprep.subr.mxu0 0.0
    %279 = vmatpush1.msra.mxu0 0.0
    %280 = vmatprep.subr.mxu0 %v118
    %281 = vmatpush1.msra.mxu0 %v117
    %282 = vmatprep.subr.mxu0 %v110
    %283 = vmatpush1.msra.mxu0 %v109
    %284 = vmatprep.subr.mxu0 %v102
    %285 = vmatpush1.msra.mxu0 %v101
    %286 = vmatprep.subr.mxu0 %v94
    %287 = vmatpush1.msra.mxu0 %v93
    %288 = vmatprep.subr.mxu0 %v86
    %289 = vmatpush1.msra.mxu0 %v85
    %290 = vmatprep.subr.mxu0 %v78
    %291 = vmatpush1.msra.mxu0 %v77
    %292 = vmatprep.subr.mxu0 %v70
    %293 = vmatpush1.msra.mxu0 %v69
    %294 = vmatprep.subr.mxu0 %v62
    %295 = vmatpush1.msra.mxu0 %v61
    %296 = vmatprep.subr.mxu0 0.0
    %297 = vmatpush2.msra.mxu0 0.0
    %298 = vmatprep.subr.mxu0 0.0
    %299 = vmatpush2.msra.mxu0 0.0
    %300 = vmatprep.subr.mxu0 0.0
    %301 = vmatpush2.msra.mxu0 0.0
    %302 = vmatprep.subr.mxu0 0.0
    %303 = vmatpush2.msra.mxu0 0.0
    %304 = vmatprep.subr.mxu0 0.0
    %305 = vmatpush2.msra.mxu0 0.0
    %306 = vmatprep.subr.mxu0 0.0
    %307 = vmatpush2.msra.mxu0 0.0
    %308 = vmatprep.subr.mxu0 0.0
    %309 = vmatpush2.msra.mxu0 0.0
    %310 = vmatprep.subr.mxu0 0.0
    %311 = vmatpush2.msra.mxu0 0.0
    %312 = vmatprep.subr.mxu0 0.0
    %313 = vmatpush2.msra.mxu0 0.0
    %314 = vmatprep.subr.mxu0 0.0
    %315 = vmatpush2.msra.mxu0 0.0
    %316 = vmatprep.subr.mxu0 0.0
    %317 = vmatpush2.msra.mxu0 0.0
    %318 = vmatprep.subr.mxu0 0.0
    %319 = vmatpush2.msra.mxu0 0.0
    %320 = vmatprep.subr.mxu0 0.0
    %321 = vmatpush2.msra.mxu0 0.0
    %322 = vmatprep.subr.mxu0 0.0
    %323 = vmatpush2.msra.mxu0 0.0
    %324 = vmatprep.subr.mxu0 0.0
    %325 = vmatpush2.msra.mxu0 0.0
    %326 = vmatprep.subr.mxu0 0.0
    %327 = vmatpush2.msra.mxu0 0.0
    %328 = vmatprep.mubr.f32.mxu0 0.0
    %329 = vmatmul.mubr.f32.gmra.mxu0 %v169
    %v330 = vpop.f32.mrf.mxu0
    %v331 = vadd.f32 %v130, %v330
    %v332 = vpop.f32.mrf.mxu0
    %v333 = vadd.f32 %v134, %v332
    %334 = vmatprep.mubr.f32.mxu0 0.0
    %335 = vmatmul.mubr.f32.gmra.mxu0 %v172
    %v336 = vpop.f32.mrf.mxu0
    %v337 = vadd.f32 %v130, %v336
    %v338 = vpop.f32.mrf.mxu0
    %v339 = vadd.f32 %v134, %v338
    %340 = vmatprep.mubr.f32.mxu0 0.0
    %341 = vmatmul.mubr.f32.gmra.mxu0 %v175
    %v342 = vpop.f32.mrf.mxu0
    %v343 = vadd.f32 %v130, %v342
    %v344 = vpop.f32.mrf.mxu0
    %v345 = vadd.f32 %v134, %v344
    %346 = vmatprep.mubr.f32.mxu0 0.0
    %347 = vmatmul.mubr.f32.gmra.mxu0 %v178
    %v348 = vpop.f32.mrf.mxu0
    %v349 = vadd.f32 %v130, %v348
    %v350 = vpop.f32.mrf.mxu0
    %v351 = vadd.f32 %v134, %v350
    %352 = vmatprep.mubr.f32.mxu0 0.0
    %353 = vmatmul.mubr.f32.gmra.mxu0 %v181
    %v354 = vpop.f32.mrf.mxu0
    %v355 = vadd.f32 %v130, %v354
    %v356 = vpop.f32.mrf.mxu0
    %v357 = vadd.f32 %v134, %v356
    %358 = vmatprep.mubr.f32.mxu0 0.0
    %359 = vmatmul.mubr.f32.gmra.mxu0 %v184
    %v360 = vpop.f32.mrf.mxu0
    %v361 = vadd.f32 %v130, %v360
    %v362 = vpop.f32.mrf.mxu0
    %v363 = vadd.f32 %v134, %v362
    %364 = vmatprep.mubr.f32.mxu0 0.0
    %365 = vmatmul.mubr.f32.gmra.mxu0 %v187
    %v366 = vpop.f32.mrf.mxu0
    %v367 = vadd.f32 %v130, %v366
    %v368 = vpop.f32.mrf.mxu0
    %v369 = vadd.f32 %v134, %v368
    %370 = vmatprep.mubr.f32.mxu0 0.0
    %371 = vmatmul.mubr.f32.gmra.mxu0 %v190
    %v372 = vpop.f32.mrf.mxu0
    %v373 = vadd.f32 %v130, %v372
    %v374 = vpop.f32.mrf.mxu0
    %v375 = vadd.f32 %v134, %v374
    %376 = vmatprep.mubr.f32.mxu0 0.0
    %377 = vmatmul.mubr.f32.gmra.mxu0 %v193
    %v378 = vpop.f32.mrf.mxu0
    %v379 = vadd.f32 %v130, %v378
    %v380 = vpop.f32.mrf.mxu0
    %v381 = vadd.f32 %v134, %v380
    %382 = vmatprep.mubr.f32.mxu0 0.0
    %383 = vmatmul.mubr.f32.gmra.mxu0 %v196
    %v384 = vpop.f32.mrf.mxu0
    %v385 = vadd.f32 %v130, %v384
    %v386 = vpop.f32.mrf.mxu0
    %v387 = vadd.f32 %v134, %v386
    %388 = vmatprep.mubr.f32.mxu0 0.0
    %389 = vmatmul.mubr.f32.gmra.mxu0 %v199
    %v390 = vpop.f32.mrf.mxu0
    %v391 = vadd.f32 %v130, %v390
    %v392 = vpop.f32.mrf.mxu0
    %v393 = vadd.f32 %v134, %v392
    %394 = vmatprep.mubr.f32.mxu0 0.0
    %395 = vmatmul.mubr.f32.gmra.mxu0 %v202
    %v396 = vpop.f32.mrf.mxu0
    %v397 = vadd.f32 %v130, %v396
    %v398 = vpop.f32.mrf.mxu0
    %v399 = vadd.f32 %v134, %v398
    %400 = vmatprep.mubr.f32.mxu0 0.0
    %401 = vmatmul.mubr.f32.gmra.mxu0 %v205
    %v402 = vpop.f32.mrf.mxu0
    %v403 = vadd.f32 %v130, %v402
    %v404 = vpop.f32.mrf.mxu0
    %v405 = vadd.f32 %v134, %v404
    %406 = vmatprep.mubr.f32.mxu0 0.0
    %407 = vmatmul.mubr.f32.gmra.mxu0 %v208
    %v408 = vpop.f32.mrf.mxu0
    %v409 = vadd.f32 %v130, %v408
    %v410 = vpop.f32.mrf.mxu0
    %v411 = vadd.f32 %v134, %v410
    %412 = vmatprep.mubr.f32.mxu0 0.0
    %413 = vmatmul.mubr.f32.gmra.mxu0 %v211
    %v414 = vpop.f32.mrf.mxu0
    %v415 = vadd.f32 %v130, %v414
    %v416 = vpop.f32.mrf.mxu0
    %v417 = vadd.f32 %v134, %v416
    %418 = vmatprep.mubr.f32.mxu0 0.0
    %419 = vmatmul.mubr.f32.gmra.mxu0 %v214
    %v420 = vpop.f32.mrf.mxu0
    %v421 = vadd.f32 %v130, %v420
    %v422 = vpop.f32.mrf.mxu0
    %v423 = vadd.f32 %v134, %v422
    %424 = vmatprep.mubr.f32.mxu0 0.0
    %425 = vmatmul.mubr.f32.gmra.mxu0 %v217
    %v426 = vpop.f32.mrf.mxu0
    %v427 = vadd.f32 %v130, %v426
    %v428 = vpop.f32.mrf.mxu0
    %v429 = vadd.f32 %v134, %v428
    %430 = vmatprep.mubr.f32.mxu0 0.0
    %431 = vmatmul.mubr.f32.gmra.mxu0 %v220
    %v432 = vpop.f32.mrf.mxu0
    %v433 = vadd.f32 %v130, %v432
    %v434 = vpop.f32.mrf.mxu0
    %v435 = vadd.f32 %v134, %v434
    %436 = vmatprep.mubr.f32.mxu0 0.0
    %437 = vmatmul.mubr.f32.gmra.mxu0 %v223
    %v438 = vpop.f32.mrf.mxu0
    %v439 = vadd.f32 %v130, %v438
    %v440 = vpop.f32.mrf.mxu0
    %v441 = vadd.f32 %v134, %v440
    %442 = vmatprep.mubr.f32.mxu0 0.0
    %443 = vmatmul.mubr.f32.gmra.mxu0 %v226
    %v444 = vpop.f32.mrf.mxu0
    %v445 = vadd.f32 %v130, %v444
    %v446 = vpop.f32.mrf.mxu0
    %v447 = vadd.f32 %v134, %v446
    %448 = vmatprep.mubr.f32.mxu0 0.0
    %449 = vmatmul.mubr.f32.gmra.mxu0 %v229
    %v450 = vpop.f32.mrf.mxu0
    %v451 = vadd.f32 %v130, %v450
    %v452 = vpop.f32.mrf.mxu0
    %v453 = vadd.f32 %v134, %v452
    %454 = vmatprep.mubr.f32.mxu0 0.0
    %455 = vmatmul.mubr.f32.gmra.mxu0 %v232
    %v456 = vpop.f32.mrf.mxu0
    %v457 = vadd.f32 %v130, %v456
    %v458 = vpop.f32.mrf.mxu0
    %v459 = vadd.f32 %v134, %v458
    %460 = vmatprep.mubr.f32.mxu0 0.0
    %461 = vmatmul.mubr.f32.gmra.mxu0 %v235
    %v462 = vpop.f32.mrf.mxu0
    %v463 = vadd.f32 %v130, %v462
    %v464 = vpop.f32.mrf.mxu0
    %v465 = vadd.f32 %v134, %v464
    %466 = vmatprep.mubr.f32.mxu0 0.0
    %467 = vmatmul.mubr.f32.gmra.mxu0 %v238
    %v468 = vpop.f32.mrf.mxu0
    %v469 = vadd.f32 %v130, %v468
    %v470 = vpop.f32.mrf.mxu0
    %v471 = vadd.f32 %v134, %v470
    %472 = vmatprep.mubr.f32.mxu0 0.0
    %473 = vmatmul.mubr.f32.gmra.mxu0 %v241
    %v474 = vpop.f32.mrf.mxu0
    %v475 = vadd.f32 %v130, %v474
    %v476 = vpop.f32.mrf.mxu0
    %v477 = vadd.f32 %v134, %v476
    %478 = vmatprep.mubr.f32.mxu0 0.0
    %479 = vmatmul.mubr.f32.gmra.mxu0 %v244
    %v480 = vpop.f32.mrf.mxu0
    %v481 = vadd.f32 %v130, %v480
    %v482 = vpop.f32.mrf.mxu0
    %v483 = vadd.f32 %v134, %v482
    %484 = vmatprep.mubr.f32.mxu0 0.0
    %485 = vmatmul.mubr.f32.gmra.mxu0 %v247
    %v486 = vpop.f32.mrf.mxu0
    %v487 = vadd.f32 %v130, %v486
    %v488 = vpop.f32.mrf.mxu0
    %v489 = vadd.f32 %v134, %v488
    %490 = vmatprep.mubr.f32.mxu0 0.0
    %491 = vmatmul.mubr.f32.gmra.mxu0 %v250
    %v492 = vpop.f32.mrf.mxu0
    %v493 = vadd.f32 %v130, %v492
    %v494 = vpop.f32.mrf.mxu0
    %v495 = vadd.f32 %v134, %v494
    %496 = vmatprep.mubr.f32.mxu0 0.0
    %497 = vmatmul.mubr.f32.gmra.mxu0 %v253
    %v498 = vpop.f32.mrf.mxu0
    %v499 = vadd.f32 %v130, %v498
    %v500 = vpop.f32.mrf.mxu0
    %v501 = vadd.f32 %v134, %v500
    %502 = vmatprep.mubr.f32.mxu0 0.0
    %503 = vmatmul.mubr.f32.gmra.mxu0 %v256
    %v504 = vpop.f32.mrf.mxu0
    %v505 = vadd.f32 %v130, %v504
    %v506 = vpop.f32.mrf.mxu0
    %v507 = vadd.f32 %v134, %v506
    %508 = vmatprep.mubr.f32.mxu0 0.0
    %509 = vmatmul.mubr.f32.gmra.mxu0 %v259
    %v510 = vpop.f32.mrf.mxu0
    %v511 = vadd.f32 %v130, %v510
    %v512 = vpop.f32.mrf.mxu0
    %v513 = vadd.f32 %v134, %v512
    %514 = vmatprep.mubr.f32.mxu0 0.0
    %515 = vmatmul.mubr.f32.gmra.mxu0 %v262
    %v516 = vpop.f32.mrf.mxu0
    %v517 = vadd.f32 %v130, %v516
    %v518 = vpop.f32.mrf.mxu0
    %v519 = vadd.f32 %v134, %v518
    %520 = vdwg.mxu0
    %521 = vmatprep.subr.mxu0 0.0
    %522 = vmatpush1.msra.mxu0 0.0
    %523 = vmatprep.subr.mxu0 0.0
    %524 = vmatpush1.msra.mxu0 0.0
    %525 = vmatprep.subr.mxu0 0.0
    %526 = vmatpush1.msra.mxu0 0.0
    %527 = vmatprep.subr.mxu0 0.0
    %528 = vmatpush1.msra.mxu0 0.0
    %529 = vmatprep.subr.mxu0 0.0
    %530 = vmatpush1.msra.mxu0 0.0
    %531 = vmatprep.subr.mxu0 0.0
    %532 = vmatpush1.msra.mxu0 0.0
    %533 = vmatprep.subr.mxu0 0.0
    %534 = vmatpush1.msra.mxu0 0.0
    %535 = vmatprep.subr.mxu0 0.0
    %536 = vmatpush1.msra.mxu0 0.0
    %537 = vmatprep.subr.mxu0 %v120
    %538 = vmatpush1.msra.mxu0 %v119
    %539 = vmatprep.subr.mxu0 %v112
    %540 = vmatpush1.msra.mxu0 %v111
    %541 = vmatprep.subr.mxu0 %v104
    %542 = vmatpush1.msra.mxu0 %v103
    %543 = vmatprep.subr.mxu0 %v96
    %544 = vmatpush1.msra.mxu0 %v95
    %545 = vmatprep.subr.mxu0 %v88
    %546 = vmatpush1.msra.mxu0 %v87
    %547 = vmatprep.subr.mxu0 %v80
    %548 = vmatpush1.msra.mxu0 %v79
    %549 = vmatprep.subr.mxu0 %v72
    %550 = vmatpush1.msra.mxu0 %v71
    %551 = vmatprep.subr.mxu0 %v64
    %552 = vmatpush1.msra.mxu0 %v63
    %553 = vmatprep.subr.mxu0 0.0
    %554 = vmatpush2.msra.mxu0 0.0
    %555 = vmatprep.subr.mxu0 0.0
    %556 = vmatpush2.msra.mxu0 0.0
    %557 = vmatprep.subr.mxu0 0.0
    %558 = vmatpush2.msra.mxu0 0.0
    %559 = vmatprep.subr.mxu0 0.0
    %560 = vmatpush2.msra.mxu0 0.0
    %561 = vmatprep.subr.mxu0 0.0
    %562 = vmatpush2.msra.mxu0 0.0
    %563 = vmatprep.subr.mxu0 0.0
    %564 = vmatpush2.msra.mxu0 0.0
    %565 = vmatprep.subr.mxu0 0.0
    %566 = vmatpush2.msra.mxu0 0.0
    %567 = vmatprep.subr.mxu0 0.0
    %568 = vmatpush2.msra.mxu0 0.0
    %569 = vmatprep.subr.mxu0 0.0
    %570 = vmatpush2.msra.mxu0 0.0
    %571 = vmatprep.subr.mxu0 0.0
    %572 = vmatpush2.msra.mxu0 0.0
    %573 = vmatprep.subr.mxu0 0.0
    %574 = vmatpush2.msra.mxu0 0.0
    %575 = vmatprep.subr.mxu0 0.0
    %576 = vmatpush2.msra.mxu0 0.0
    %577 = vmatprep.subr.mxu0 0.0
    %578 = vmatpush2.msra.mxu0 0.0
    %579 = vmatprep.subr.mxu0 0.0
    %580 = vmatpush2.msra.mxu0 0.0
    %581 = vmatprep.subr.mxu0 0.0
    %582 = vmatpush2.msra.mxu0 0.0
    %583 = vmatprep.subr.mxu0 0.0
    %584 = vmatpush2.msra.mxu0 0.0
    %585 = vmatprep.mubr.f32.mxu0 0.0
    %586 = vmatmul.mubr.f32.gmra.mxu0 %v169
    %v587 = vpop.f32.mrf.mxu0
    %v588 = vadd.f32 %v138, %v587
    %v589 = vpop.f32.mrf.mxu0
    %v590 = vadd.f32 %v142, %v589
    %591 = vmatprep.mubr.f32.mxu0 0.0
    %592 = vmatmul.mubr.f32.gmra.mxu0 %v172
    %v593 = vpop.f32.mrf.mxu0
    %v594 = vadd.f32 %v138, %v593
    %v595 = vpop.f32.mrf.mxu0
    %v596 = vadd.f32 %v142, %v595
    %597 = vmatprep.mubr.f32.mxu0 0.0
    %598 = vmatmul.mubr.f32.gmra.mxu0 %v175
    %v599 = vpop.f32.mrf.mxu0
    %v600 = vadd.f32 %v138, %v599
    %v601 = vpop.f32.mrf.mxu0
    %v602 = vadd.f32 %v142, %v601
    %603 = vmatprep.mubr.f32.mxu0 0.0
    %604 = vmatmul.mubr.f32.gmra.mxu0 %v178
    %v605 = vpop.f32.mrf.mxu0
    %v606 = vadd.f32 %v138, %v605
    %v607 = vpop.f32.mrf.mxu0
    %v608 = vadd.f32 %v142, %v607
    %609 = vmatprep.mubr.f32.mxu0 0.0
    %610 = vmatmul.mubr.f32.gmra.mxu0 %v181
    %v611 = vpop.f32.mrf.mxu0
    %v612 = vadd.f32 %v138, %v611
    %v613 = vpop.f32.mrf.mxu0
    %v614 = vadd.f32 %v142, %v613
    %615 = vmatprep.mubr.f32.mxu0 0.0
    %616 = vmatmul.mubr.f32.gmra.mxu0 %v184
    %v617 = vpop.f32.mrf.mxu0
    %v618 = vadd.f32 %v138, %v617
    %v619 = vpop.f32.mrf.mxu0
    %v620 = vadd.f32 %v142, %v619
    %621 = vmatprep.mubr.f32.mxu0 0.0
    %622 = vmatmul.mubr.f32.gmra.mxu0 %v187
    %v623 = vpop.f32.mrf.mxu0
    %v624 = vadd.f32 %v138, %v623
    %v625 = vpop.f32.mrf.mxu0
    %v626 = vadd.f32 %v142, %v625
    %627 = vmatprep.mubr.f32.mxu0 0.0
    %628 = vmatmul.mubr.f32.gmra.mxu0 %v190
    %v629 = vpop.f32.mrf.mxu0
    %v630 = vadd.f32 %v138, %v629
    %v631 = vpop.f32.mrf.mxu0
    %v632 = vadd.f32 %v142, %v631
    %633 = vmatprep.mubr.f32.mxu0 0.0
    %634 = vmatmul.mubr.f32.gmra.mxu0 %v193
    %v635 = vpop.f32.mrf.mxu0
    %v636 = vadd.f32 %v138, %v635
    %v637 = vpop.f32.mrf.mxu0
    %v638 = vadd.f32 %v142, %v637
    %639 = vmatprep.mubr.f32.mxu0 0.0
    %640 = vmatmul.mubr.f32.gmra.mxu0 %v196
    %v641 = vpop.f32.mrf.mxu0
    %v642 = vadd.f32 %v138, %v641
    %v643 = vpop.f32.mrf.mxu0
    %v644 = vadd.f32 %v142, %v643
    %645 = vmatprep.mubr.f32.mxu0 0.0
    %646 = vmatmul.mubr.f32.gmra.mxu0 %v199
    %v647 = vpop.f32.mrf.mxu0
    %v648 = vadd.f32 %v138, %v647
    %v649 = vpop.f32.mrf.mxu0
    %v650 = vadd.f32 %v142, %v649
    %651 = vmatprep.mubr.f32.mxu0 0.0
    %652 = vmatmul.mubr.f32.gmra.mxu0 %v202
    %v653 = vpop.f32.mrf.mxu0
    %v654 = vadd.f32 %v138, %v653
    %v655 = vpop.f32.mrf.mxu0
    %v656 = vadd.f32 %v142, %v655
    %657 = vmatprep.mubr.f32.mxu0 0.0
    %658 = vmatmul.mubr.f32.gmra.mxu0 %v205
    %v659 = vpop.f32.mrf.mxu0
    %v660 = vadd.f32 %v138, %v659
    %v661 = vpop.f32.mrf.mxu0
    %v662 = vadd.f32 %v142, %v661
    %663 = vmatprep.mubr.f32.mxu0 0.0
    %664 = vmatmul.mubr.f32.gmra.mxu0 %v208
    %v665 = vpop.f32.mrf.mxu0
    %v666 = vadd.f32 %v138, %v665
    %v667 = vpop.f32.mrf.mxu0
    %v668 = vadd.f32 %v142, %v667
    %669 = vmatprep.mubr.f32.mxu0 0.0
    %670 = vmatmul.mubr.f32.gmra.mxu0 %v211
    %v671 = vpop.f32.mrf.mxu0
    %v672 = vadd.f32 %v138, %v671
    %v673 = vpop.f32.mrf.mxu0
    %v674 = vadd.f32 %v142, %v673
    %675 = vmatprep.mubr.f32.mxu0 0.0
    %676 = vmatmul.mubr.f32.gmra.mxu0 %v214
    %v677 = vpop.f32.mrf.mxu0
    %v678 = vadd.f32 %v138, %v677
    %v679 = vpop.f32.mrf.mxu0
    %v680 = vadd.f32 %v142, %v679
    %681 = vmatprep.mubr.f32.mxu0 0.0
    %682 = vmatmul.mubr.f32.gmra.mxu0 %v217
    %v683 = vpop.f32.mrf.mxu0
    %v684 = vadd.f32 %v138, %v683
    %v685 = vpop.f32.mrf.mxu0
    %v686 = vadd.f32 %v142, %v685
    %687 = vmatprep.mubr.f32.mxu0 0.0
    %688 = vmatmul.mubr.f32.gmra.mxu0 %v220
    %v689 = vpop.f32.mrf.mxu0
    %v690 = vadd.f32 %v138, %v689
    %v691 = vpop.f32.mrf.mxu0
    %v692 = vadd.f32 %v142, %v691
    %693 = vmatprep.mubr.f32.mxu0 0.0
    %694 = vmatmul.mubr.f32.gmra.mxu0 %v223
    %v695 = vpop.f32.mrf.mxu0
    %v696 = vadd.f32 %v138, %v695
    %v697 = vpop.f32.mrf.mxu0
    %v698 = vadd.f32 %v142, %v697
    %699 = vmatprep.mubr.f32.mxu0 0.0
    %700 = vmatmul.mubr.f32.gmra.mxu0 %v226
    %v701 = vpop.f32.mrf.mxu0
    %v702 = vadd.f32 %v138, %v701
    %v703 = vpop.f32.mrf.mxu0
    %v704 = vadd.f32 %v142, %v703
    %705 = vmatprep.mubr.f32.mxu0 0.0
    %706 = vmatmul.mubr.f32.gmra.mxu0 %v229
    %v707 = vpop.f32.mrf.mxu0
    %v708 = vadd.f32 %v138, %v707
    %v709 = vpop.f32.mrf.mxu0
    %v710 = vadd.f32 %v142, %v709
    %711 = vmatprep.mubr.f32.mxu0 0.0
    %712 = vmatmul.mubr.f32.gmra.mxu0 %v232
    %v713 = vpop.f32.mrf.mxu0
    %v714 = vadd.f32 %v138, %v713
    %v715 = vpop.f32.mrf.mxu0
    %v716 = vadd.f32 %v142, %v715
    %717 = vmatprep.mubr.f32.mxu0 0.0
    %718 = vmatmul.mubr.f32.gmra.mxu0 %v235
    %v719 = vpop.f32.mrf.mxu0
    %v720 = vadd.f32 %v138, %v719
    %v721 = vpop.f32.mrf.mxu0
    %v722 = vadd.f32 %v142, %v721
    %723 = vmatprep.mubr.f32.mxu0 0.0
    %724 = vmatmul.mubr.f32.gmra.mxu0 %v238
    %v725 = vpop.f32.mrf.mxu0
    %v726 = vadd.f32 %v138, %v725
    %v727 = vpop.f32.mrf.mxu0
    %v728 = vadd.f32 %v142, %v727
    %729 = vmatprep.mubr.f32.mxu0 0.0
    %730 = vmatmul.mubr.f32.gmra.mxu0 %v241
    %v731 = vpop.f32.mrf.mxu0
    %v732 = vadd.f32 %v138, %v731
    %v733 = vpop.f32.mrf.mxu0
    %v734 = vadd.f32 %v142, %v733
    %735 = vmatprep.mubr.f32.mxu0 0.0
    %736 = vmatmul.mubr.f32.gmra.mxu0 %v244
    %v737 = vpop.f32.mrf.mxu0
    %v738 = vadd.f32 %v138, %v737
    %v739 = vpop.f32.mrf.mxu0
    %v740 = vadd.f32 %v142, %v739
    %741 = vmatprep.mubr.f32.mxu0 0.0
    %742 = vmatmul.mubr.f32.gmra.mxu0 %v247
    %v743 = vpop.f32.mrf.mxu0
    %v744 = vadd.f32 %v138, %v743
    %v745 = vpop.f32.mrf.mxu0
    %v746 = vadd.f32 %v142, %v745
    %747 = vmatprep.mubr.f32.mxu0 0.0
    %748 = vmatmul.mubr.f32.gmra.mxu0 %v250
    %v749 = vpop.f32.mrf.mxu0
    %v750 = vadd.f32 %v138, %v749
    %v751 = vpop.f32.mrf.mxu0
    %v752 = vadd.f32 %v142, %v751
    %753 = vmatprep.mubr.f32.mxu0 0.0
    %754 = vmatmul.mubr.f32.gmra.mxu0 %v253
    %v755 = vpop.f32.mrf.mxu0
    %v756 = vadd.f32 %v138, %v755
    %v757 = vpop.f32.mrf.mxu0
    %v758 = vadd.f32 %v142, %v757
    %759 = vmatprep.mubr.f32.mxu0 0.0
    %760 = vmatmul.mubr.f32.gmra.mxu0 %v256
    %v761 = vpop.f32.mrf.mxu0
    %v762 = vadd.f32 %v138, %v761
    %v763 = vpop.f32.mrf.mxu0
    %v764 = vadd.f32 %v142, %v763
    %765 = vmatprep.mubr.f32.mxu0 0.0
    %766 = vmatmul.mubr.f32.gmra.mxu0 %v259
    %v767 = vpop.f32.mrf.mxu0
    %v768 = vadd.f32 %v138, %v767
    %v769 = vpop.f32.mrf.mxu0
    %v770 = vadd.f32 %v142, %v769
    %771 = vmatprep.mubr.f32.mxu0 0.0
    %772 = vmatmul.mubr.f32.gmra.mxu0 %v262
    %v773 = vpop.f32.mrf.mxu0
    %v774 = vadd.f32 %v138, %v773
    %v775 = vpop.f32.mrf.mxu0
    %v776 = vadd.f32 %v142, %v775
    %777 = vdwg.mxu0
    %778 = vmatprep.subr.mxu0 0.0
    %779 = vmatpush1.msra.mxu0 0.0
    %780 = vmatprep.subr.mxu0 0.0
    %781 = vmatpush1.msra.mxu0 0.0
    %782 = vmatprep.subr.mxu0 0.0
    %783 = vmatpush1.msra.mxu0 0.0
    %784 = vmatprep.subr.mxu0 0.0
    %785 = vmatpush1.msra.mxu0 0.0
    %786 = vmatprep.subr.mxu0 0.0
    %787 = vmatpush1.msra.mxu0 0.0
    %788 = vmatprep.subr.mxu0 0.0
    %789 = vmatpush1.msra.mxu0 0.0
    %790 = vmatprep.subr.mxu0 0.0
    %791 = vmatpush1.msra.mxu0 0.0
    %792 = vmatprep.subr.mxu0 0.0
    %793 = vmatpush1.msra.mxu0 0.0
    %794 = vmatprep.subr.mxu0 %v122
    %795 = vmatpush1.msra.mxu0 %v121
    %796 = vmatprep.subr.mxu0 %v114
    %797 = vmatpush1.msra.mxu0 %v113
    %798 = vmatprep.subr.mxu0 %v106
    %799 = vmatpush1.msra.mxu0 %v105
    %800 = vmatprep.subr.mxu0 %v98
    %801 = vmatpush1.msra.mxu0 %v97
    %802 = vmatprep.subr.mxu0 %v90
    %803 = vmatpush1.msra.mxu0 %v89
    %804 = vmatprep.subr.mxu0 %v82
    %805 = vmatpush1.msra.mxu0 %v81
    %806 = vmatprep.subr.mxu0 %v74
    %807 = vmatpush1.msra.mxu0 %v73
    %808 = vmatprep.subr.mxu0 %v66
    %809 = vmatpush1.msra.mxu0 %v65
    %810 = vmatprep.subr.mxu0 0.0
    %811 = vmatpush2.msra.mxu0 0.0
    %812 = vmatprep.subr.mxu0 0.0
    %813 = vmatpush2.msra.mxu0 0.0
    %814 = vmatprep.subr.mxu0 0.0
    %815 = vmatpush2.msra.mxu0 0.0
    %816 = vmatprep.subr.mxu0 0.0
    %817 = vmatpush2.msra.mxu0 0.0
    %818 = vmatprep.subr.mxu0 0.0
    %819 = vmatpush2.msra.mxu0 0.0
    %820 = vmatprep.subr.mxu0 0.0
    %821 = vmatpush2.msra.mxu0 0.0
    %822 = vmatprep.subr.mxu0 0.0
    %823 = vmatpush2.msra.mxu0 0.0
    %824 = vmatprep.subr.mxu0 0.0
    %825 = vmatpush2.msra.mxu0 0.0
    %826 = vmatprep.subr.mxu0 0.0
    %827 = vmatpush2.msra.mxu0 0.0
    %828 = vmatprep.subr.mxu0 0.0
    %829 = vmatpush2.msra.mxu0 0.0
    %830 = vmatprep.subr.mxu0 0.0
    %831 = vmatpush2.msra.mxu0 0.0
    %832 = vmatprep.subr.mxu0 0.0
    %833 = vmatpush2.msra.mxu0 0.0
    %834 = vmatprep.subr.mxu0 0.0
    %835 = vmatpush2.msra.mxu0 0.0
    %836 = vmatprep.subr.mxu0 0.0
    %837 = vmatpush2.msra.mxu0 0.0
    %838 = vmatprep.subr.mxu0 0.0
    %839 = vmatpush2.msra.mxu0 0.0
    %840 = vmatprep.subr.mxu0 0.0
    %841 = vmatpush2.msra.mxu0 0.0
    %842 = vmatprep.mubr.f32.mxu0 0.0
    %843 = vmatmul.mubr.f32.gmra.mxu0 %v169
    %v844 = vpop.f32.mrf.mxu0
    %v845 = vadd.f32 %v146, %v844
    %v846 = vpop.f32.mrf.mxu0
    %v847 = vadd.f32 %v150, %v846
    %848 = vmatprep.mubr.f32.mxu0 0.0
    %849 = vmatmul.mubr.f32.gmra.mxu0 %v172
    %v850 = vpop.f32.mrf.mxu0
    %v851 = vadd.f32 %v146, %v850
    %v852 = vpop.f32.mrf.mxu0
    %v853 = vadd.f32 %v150, %v852
    %854 = vmatprep.mubr.f32.mxu0 0.0
    %855 = vmatmul.mubr.f32.gmra.mxu0 %v175
    %v856 = vpop.f32.mrf.mxu0
    %v857 = vadd.f32 %v146, %v856
    %v858 = vpop.f32.mrf.mxu0
    %v859 = vadd.f32 %v150, %v858
    %860 = vmatprep.mubr.f32.mxu0 0.0
    %861 = vmatmul.mubr.f32.gmra.mxu0 %v178
    %v862 = vpop.f32.mrf.mxu0
    %v863 = vadd.f32 %v146, %v862
    %v864 = vpop.f32.mrf.mxu0
    %v865 = vadd.f32 %v150, %v864
    %866 = vmatprep.mubr.f32.mxu0 0.0
    %867 = vmatmul.mubr.f32.gmra.mxu0 %v181
    %v868 = vpop.f32.mrf.mxu0
    %v869 = vadd.f32 %v146, %v868
    %v870 = vpop.f32.mrf.mxu0
    %v871 = vadd.f32 %v150, %v870
    %872 = vmatprep.mubr.f32.mxu0 0.0
    %873 = vmatmul.mubr.f32.gmra.mxu0 %v184
    %v874 = vpop.f32.mrf.mxu0
    %v875 = vadd.f32 %v146, %v874
    %v876 = vpop.f32.mrf.mxu0
    %v877 = vadd.f32 %v150, %v876
    %878 = vmatprep.mubr.f32.mxu0 0.0
    %879 = vmatmul.mubr.f32.gmra.mxu0 %v187
    %v880 = vpop.f32.mrf.mxu0
    %v881 = vadd.f32 %v146, %v880
    %v882 = vpop.f32.mrf.mxu0
    %v883 = vadd.f32 %v150, %v882
    %884 = vmatprep.mubr.f32.mxu0 0.0
    %885 = vmatmul.mubr.f32.gmra.mxu0 %v190
    %v886 = vpop.f32.mrf.mxu0
    %v887 = vadd.f32 %v146, %v886
    %v888 = vpop.f32.mrf.mxu0
    %v889 = vadd.f32 %v150, %v888
    %890 = vmatprep.mubr.f32.mxu0 0.0
    %891 = vmatmul.mubr.f32.gmra.mxu0 %v193
    %v892 = vpop.f32.mrf.mxu0
    %v893 = vadd.f32 %v146, %v892
    %v894 = vpop.f32.mrf.mxu0
    %v895 = vadd.f32 %v150, %v894
    %896 = vmatprep.mubr.f32.mxu0 0.0
    %897 = vmatmul.mubr.f32.gmra.mxu0 %v196
    %v898 = vpop.f32.mrf.mxu0
    %v899 = vadd.f32 %v146, %v898
    %v900 = vpop.f32.mrf.mxu0
    %v901 = vadd.f32 %v150, %v900
    %902 = vmatprep.mubr.f32.mxu0 0.0
    %903 = vmatmul.mubr.f32.gmra.mxu0 %v199
    %v904 = vpop.f32.mrf.mxu0
    %v905 = vadd.f32 %v146, %v904
    %v906 = vpop.f32.mrf.mxu0
    %v907 = vadd.f32 %v150, %v906
    %908 = vmatprep.mubr.f32.mxu0 0.0
    %909 = vmatmul.mubr.f32.gmra.mxu0 %v202
    %v910 = vpop.f32.mrf.mxu0
    %v911 = vadd.f32 %v146, %v910
    %v912 = vpop.f32.mrf.mxu0
    %v913 = vadd.f32 %v150, %v912
    %914 = vmatprep.mubr.f32.mxu0 0.0
    %915 = vmatmul.mubr.f32.gmra.mxu0 %v205
    %v916 = vpop.f32.mrf.mxu0
    %v917 = vadd.f32 %v146, %v916
    %v918 = vpop.f32.mrf.mxu0
    %v919 = vadd.f32 %v150, %v918
    %920 = vmatprep.mubr.f32.mxu0 0.0
    %921 = vmatmul.mubr.f32.gmra.mxu0 %v208
    %v922 = vpop.f32.mrf.mxu0
    %v923 = vadd.f32 %v146, %v922
    %v924 = vpop.f32.mrf.mxu0
    %v925 = vadd.f32 %v150, %v924
    %926 = vmatprep.mubr.f32.mxu0 0.0
    %927 = vmatmul.mubr.f32.gmra.mxu0 %v211
    %v928 = vpop.f32.mrf.mxu0
    %v929 = vadd.f32 %v146, %v928
    %v930 = vpop.f32.mrf.mxu0
    %v931 = vadd.f32 %v150, %v930
    %932 = vmatprep.mubr.f32.mxu0 0.0
    %933 = vmatmul.mubr.f32.gmra.mxu0 %v214
    %v934 = vpop.f32.mrf.mxu0
    %v935 = vadd.f32 %v146, %v934
    %v936 = vpop.f32.mrf.mxu0
    %v937 = vadd.f32 %v150, %v936
    %938 = vmatprep.mubr.f32.mxu0 0.0
    %939 = vmatmul.mubr.f32.gmra.mxu0 %v217
    %v940 = vpop.f32.mrf.mxu0
    %v941 = vadd.f32 %v146, %v940
    %v942 = vpop.f32.mrf.mxu0
    %v943 = vadd.f32 %v150, %v942
    %944 = vmatprep.mubr.f32.mxu0 0.0
    %945 = vmatmul.mubr.f32.gmra.mxu0 %v220
    %v946 = vpop.f32.mrf.mxu0
    %v947 = vadd.f32 %v146, %v946
    %v948 = vpop.f32.mrf.mxu0
    %v949 = vadd.f32 %v150, %v948
    %950 = vmatprep.mubr.f32.mxu0 0.0
    %951 = vmatmul.mubr.f32.gmra.mxu0 %v223
    %v952 = vpop.f32.mrf.mxu0
    %v953 = vadd.f32 %v146, %v952
    %v954 = vpop.f32.mrf.mxu0
    %v955 = vadd.f32 %v150, %v954
    %956 = vmatprep.mubr.f32.mxu0 0.0
    %957 = vmatmul.mubr.f32.gmra.mxu0 %v226
    %v958 = vpop.f32.mrf.mxu0
    %v959 = vadd.f32 %v146, %v958
    %v960 = vpop.f32.mrf.mxu0
    %v961 = vadd.f32 %v150, %v960
    %962 = vmatprep.mubr.f32.mxu0 0.0
    %963 = vmatmul.mubr.f32.gmra.mxu0 %v229
    %v964 = vpop.f32.mrf.mxu0
    %v965 = vadd.f32 %v146, %v964
    %v966 = vpop.f32.mrf.mxu0
    %v967 = vadd.f32 %v150, %v966
    %968 = vmatprep.mubr.f32.mxu0 0.0
    %969 = vmatmul.mubr.f32.gmra.mxu0 %v232
    %v970 = vpop.f32.mrf.mxu0
    %v971 = vadd.f32 %v146, %v970
    %v972 = vpop.f32.mrf.mxu0
    %v973 = vadd.f32 %v150, %v972
    %974 = vmatprep.mubr.f32.mxu0 0.0
    %975 = vmatmul.mubr.f32.gmra.mxu0 %v235
    %v976 = vpop.f32.mrf.mxu0
    %v977 = vadd.f32 %v146, %v976
    %v978 = vpop.f32.mrf.mxu0
    %v979 = vadd.f32 %v150, %v978
    %980 = vmatprep.mubr.f32.mxu0 0.0
    %981 = vmatmul.mubr.f32.gmra.mxu0 %v238
    %v982 = vpop.f32.mrf.mxu0
    %v983 = vadd.f32 %v146, %v982
    %v984 = vpop.f32.mrf.mxu0
    %v985 = vadd.f32 %v150, %v984
    %986 = vmatprep.mubr.f32.mxu0 0.0
    %987 = vmatmul.mubr.f32.gmra.mxu0 %v241
    %v988 = vpop.f32.mrf.mxu0
    %v989 = vadd.f32 %v146, %v988
    %v990 = vpop.f32.mrf.mxu0
    %v991 = vadd.f32 %v150, %v990
    %992 = vmatprep.mubr.f32.mxu0 0.0
    %993 = vmatmul.mubr.f32.gmra.mxu0 %v244
    %v994 = vpop.f32.mrf.mxu0
    %v995 = vadd.f32 %v146, %v994
    %v996 = vpop.f32.mrf.mxu0
    %v997 = vadd.f32 %v150, %v996
    %998 = vmatprep.mubr.f32.mxu0 0.0
    %999 = vmatmul.mubr.f32.gmra.mxu0 %v247
    %v1000 = vpop.f32.mrf.mxu0
    %v1001 = vadd.f32 %v146, %v1000
    %v1002 = vpop.f32.mrf.mxu0
    %v1003 = vadd.f32 %v150, %v1002
    %1004 = vmatprep.mubr.f32.mxu0 0.0
    %1005 = vmatmul.mubr.f32.gmra.mxu0 %v250
    %v1006 = vpop.f32.mrf.mxu0
    %v1007 = vadd.f32 %v146, %v1006
    %v1008 = vpop.f32.mrf.mxu0
    %v1009 = vadd.f32 %v150, %v1008
    %1010 = vmatprep.mubr.f32.mxu0 0.0
    %1011 = vmatmul.mubr.f32.gmra.mxu0 %v253
    %v1012 = vpop.f32.mrf.mxu0
    %v1013 = vadd.f32 %v146, %v1012
    %v1014 = vpop.f32.mrf.mxu0
    %v1015 = vadd.f32 %v150, %v1014
    %1016 = vmatprep.mubr.f32.mxu0 0.0
    %1017 = vmatmul.mubr.f32.gmra.mxu0 %v256
    %v1018 = vpop.f32.mrf.mxu0
    %v1019 = vadd.f32 %v146, %v1018
    %v1020 = vpop.f32.mrf.mxu0
    %v1021 = vadd.f32 %v150, %v1020
    %1022 = vmatprep.mubr.f32.mxu0 0.0
    %1023 = vmatmul.mubr.f32.gmra.mxu0 %v259
    %v1024 = vpop.f32.mrf.mxu0
    %v1025 = vadd.f32 %v146, %v1024
    %v1026 = vpop.f32.mrf.mxu0
    %v1027 = vadd.f32 %v150, %v1026
    %1028 = vmatprep.mubr.f32.mxu0 0.0
    %1029 = vmatmul.mubr.f32.gmra.mxu0 %v262
    %v1030 = vpop.f32.mrf.mxu0
    %v1031 = vadd.f32 %v146, %v1030
    %v1032 = vpop.f32.mrf.mxu0
    %v1033 = vadd.f32 %v150, %v1032
    %1034 = vdwg.mxu0
    %1035 = vmatprep.subr.mxu0 0.0
    %1036 = vmatpush1.msra.mxu0 0.0
    %1037 = vmatprep.subr.mxu0 0.0
    %1038 = vmatpush1.msra.mxu0 0.0
    %1039 = vmatprep.subr.mxu0 0.0
    %1040 = vmatpush1.msra.mxu0 0.0
    %1041 = vmatprep.subr.mxu0 0.0
    %1042 = vmatpush1.msra.mxu0 0.0
    %1043 = vmatprep.subr.mxu0 0.0
    %1044 = vmatpush1.msra.mxu0 0.0
    %1045 = vmatprep.subr.mxu0 0.0
    %1046 = vmatpush1.msra.mxu0 0.0
    %1047 = vmatprep.subr.mxu0 0.0
    %1048 = vmatpush1.msra.mxu0 0.0
    %1049 = vmatprep.subr.mxu0 0.0
    %1050 = vmatpush1.msra.mxu0 0.0
    %1051 = vmatprep.subr.mxu0 %v124
    %1052 = vmatpush1.msra.mxu0 %v123
    %1053 = vmatprep.subr.mxu0 %v116
    %1054 = vmatpush1.msra.mxu0 %v115
    %1055 = vmatprep.subr.mxu0 %v108
    %1056 = vmatpush1.msra.mxu0 %v107
    %1057 = vmatprep.subr.mxu0 %v100
    %1058 = vmatpush1.msra.mxu0 %v99
    %1059 = vmatprep.subr.mxu0 %v92
    %1060 = vmatpush1.msra.mxu0 %v91
    %1061 = vmatprep.subr.mxu0 %v84
    %1062 = vmatpush1.msra.mxu0 %v83
    %1063 = vmatprep.subr.mxu0 %v76
    %1064 = vmatpush1.msra.mxu0 %v75
    %1065 = vmatprep.subr.mxu0 %v68
    %1066 = vmatpush1.msra.mxu0 %v67
    %1067 = vmatprep.subr.mxu0 0.0
    %1068 = vmatpush2.msra.mxu0 0.0
    %1069 = vmatprep.subr.mxu0 0.0
    %1070 = vmatpush2.msra.mxu0 0.0
    %1071 = vmatprep.subr.mxu0 0.0
    %1072 = vmatpush2.msra.mxu0 0.0
    %1073 = vmatprep.subr.mxu0 0.0
    %1074 = vmatpush2.msra.mxu0 0.0
    %1075 = vmatprep.subr.mxu0 0.0
    %1076 = vmatpush2.msra.mxu0 0.0
    %1077 = vmatprep.subr.mxu0 0.0
    %1078 = vmatpush2.msra.mxu0 0.0
    %1079 = vmatprep.subr.mxu0 0.0
    %1080 = vmatpush2.msra.mxu0 0.0
    %1081 = vmatprep.subr.mxu0 0.0
    %1082 = vmatpush2.msra.mxu0 0.0
    %1083 = vmatprep.subr.mxu0 0.0
    %1084 = vmatpush2.msra.mxu0 0.0
    %1085 = vmatprep.subr.mxu0 0.0
    %1086 = vmatpush2.msra.mxu0 0.0
    %1087 = vmatprep.subr.mxu0 0.0
    %1088 = vmatpush2.msra.mxu0 0.0
    %1089 = vmatprep.subr.mxu0 0.0
    %1090 = vmatpush2.msra.mxu0 0.0
    %1091 = vmatprep.subr.mxu0 0.0
    %1092 = vmatpush2.msra.mxu0 0.0
    %1093 = vmatprep.subr.mxu0 0.0
    %1094 = vmatpush2.msra.mxu0 0.0
    %1095 = vmatprep.subr.mxu0 0.0
    %1096 = vmatpush2.msra.mxu0 0.0
    %1097 = vmatprep.subr.mxu0 0.0
    %1098 = vmatpush2.msra.mxu0 0.0
    %1099 = vmatprep.mubr.f32.mxu0 0.0
    %1100 = vmatmul.mubr.f32.gmra.mxu0 %v169
    %v1101 = vpop.f32.mrf.mxu0
    %v1102 = vadd.f32 %v154, %v1101
    %v1103 = vpop.f32.mrf.mxu0
    %v1104 = vadd.f32 %v158, %v1103
    %1105 = vmatprep.mubr.f32.mxu0 0.0
    %1106 = vmatmul.mubr.f32.gmra.mxu0 %v172
    %v1107 = vpop.f32.mrf.mxu0
    %v1108 = vadd.f32 %v154, %v1107
    %v1109 = vpop.f32.mrf.mxu0
    %v1110 = vadd.f32 %v158, %v1109
    %1111 = vmatprep.mubr.f32.mxu0 0.0
    %1112 = vmatmul.mubr.f32.gmra.mxu0 %v175
    %v1113 = vpop.f32.mrf.mxu0
    %v1114 = vadd.f32 %v154, %v1113
    %v1115 = vpop.f32.mrf.mxu0
    %v1116 = vadd.f32 %v158, %v1115
    %1117 = vmatprep.mubr.f32.mxu0 0.0
    %1118 = vmatmul.mubr.f32.gmra.mxu0 %v178
    %v1119 = vpop.f32.mrf.mxu0
    %v1120 = vadd.f32 %v154, %v1119
    %v1121 = vpop.f32.mrf.mxu0
    %v1122 = vadd.f32 %v158, %v1121
    %1123 = vmatprep.mubr.f32.mxu0 0.0
    %1124 = vmatmul.mubr.f32.gmra.mxu0 %v181
    %v1125 = vpop.f32.mrf.mxu0
    %v1126 = vadd.f32 %v154, %v1125
    %v1127 = vpop.f32.mrf.mxu0
    %v1128 = vadd.f32 %v158, %v1127
    %1129 = vmatprep.mubr.f32.mxu0 0.0
    %1130 = vmatmul.mubr.f32.gmra.mxu0 %v184
    %v1131 = vpop.f32.mrf.mxu0
    %v1132 = vadd.f32 %v154, %v1131
    %v1133 = vpop.f32.mrf.mxu0
    %v1134 = vadd.f32 %v158, %v1133
    %1135 = vmatprep.mubr.f32.mxu0 0.0
    %1136 = vmatmul.mubr.f32.gmra.mxu0 %v187
    %v1137 = vpop.f32.mrf.mxu0
    %v1138 = vadd.f32 %v154, %v1137
    %v1139 = vpop.f32.mrf.mxu0
    %v1140 = vadd.f32 %v158, %v1139
    %1141 = vmatprep.mubr.f32.mxu0 0.0
    %1142 = vmatmul.mubr.f32.gmra.mxu0 %v190
    %v1143 = vpop.f32.mrf.mxu0
    %v1144 = vadd.f32 %v154, %v1143
    %v1145 = vpop.f32.mrf.mxu0
    %v1146 = vadd.f32 %v158, %v1145
    %1147 = vmatprep.mubr.f32.mxu0 0.0
    %1148 = vmatmul.mubr.f32.gmra.mxu0 %v193
    %v1149 = vpop.f32.mrf.mxu0
    %v1150 = vadd.f32 %v154, %v1149
    %v1151 = vpop.f32.mrf.mxu0
    %v1152 = vadd.f32 %v158, %v1151
    %1153 = vmatprep.mubr.f32.mxu0 0.0
    %1154 = vmatmul.mubr.f32.gmra.mxu0 %v196
    %v1155 = vpop.f32.mrf.mxu0
    %v1156 = vadd.f32 %v154, %v1155
    %v1157 = vpop.f32.mrf.mxu0
    %v1158 = vadd.f32 %v158, %v1157
    %1159 = vmatprep.mubr.f32.mxu0 0.0
    %1160 = vmatmul.mubr.f32.gmra.mxu0 %v199
    %v1161 = vpop.f32.mrf.mxu0
    %v1162 = vadd.f32 %v154, %v1161
    %v1163 = vpop.f32.mrf.mxu0
    %v1164 = vadd.f32 %v158, %v1163
    %1165 = vmatprep.mubr.f32.mxu0 0.0
    %1166 = vmatmul.mubr.f32.gmra.mxu0 %v202
    %v1167 = vpop.f32.mrf.mxu0
    %v1168 = vadd.f32 %v154, %v1167
    %v1169 = vpop.f32.mrf.mxu0
    %v1170 = vadd.f32 %v158, %v1169
    %1171 = vmatprep.mubr.f32.mxu0 0.0
    %1172 = vmatmul.mubr.f32.gmra.mxu0 %v205
    %v1173 = vpop.f32.mrf.mxu0
    %v1174 = vadd.f32 %v154, %v1173
    %v1175 = vpop.f32.mrf.mxu0
    %v1176 = vadd.f32 %v158, %v1175
    %1177 = vmatprep.mubr.f32.mxu0 0.0
    %1178 = vmatmul.mubr.f32.gmra.mxu0 %v208
    %v1179 = vpop.f32.mrf.mxu0
    %v1180 = vadd.f32 %v154, %v1179
    %v1181 = vpop.f32.mrf.mxu0
    %v1182 = vadd.f32 %v158, %v1181
    %1183 = vmatprep.mubr.f32.mxu0 0.0
    %1184 = vmatmul.mubr.f32.gmra.mxu0 %v211
    %v1185 = vpop.f32.mrf.mxu0
    %v1186 = vadd.f32 %v154, %v1185
    %v1187 = vpop.f32.mrf.mxu0
    %v1188 = vadd.f32 %v158, %v1187
    %1189 = vmatprep.mubr.f32.mxu0 0.0
    %1190 = vmatmul.mubr.f32.gmra.mxu0 %v214
    %v1191 = vpop.f32.mrf.mxu0
    %v1192 = vadd.f32 %v154, %v1191
    %v1193 = vpop.f32.mrf.mxu0
    %v1194 = vadd.f32 %v158, %v1193
    %1195 = vmatprep.mubr.f32.mxu0 0.0
    %1196 = vmatmul.mubr.f32.gmra.mxu0 %v217
    %v1197 = vpop.f32.mrf.mxu0
    %v1198 = vadd.f32 %v154, %v1197
    %v1199 = vpop.f32.mrf.mxu0
    %v1200 = vadd.f32 %v158, %v1199
    %1201 = vmatprep.mubr.f32.mxu0 0.0
    %1202 = vmatmul.mubr.f32.gmra.mxu0 %v220
    %v1203 = vpop.f32.mrf.mxu0
    %v1204 = vadd.f32 %v154, %v1203
    %v1205 = vpop.f32.mrf.mxu0
    %v1206 = vadd.f32 %v158, %v1205
    %1207 = vmatprep.mubr.f32.mxu0 0.0
    %1208 = vmatmul.mubr.f32.gmra.mxu0 %v223
    %v1209 = vpop.f32.mrf.mxu0
    %v1210 = vadd.f32 %v154, %v1209
    %v1211 = vpop.f32.mrf.mxu0
    %v1212 = vadd.f32 %v158, %v1211
    %1213 = vmatprep.mubr.f32.mxu0 0.0
    %1214 = vmatmul.mubr.f32.gmra.mxu0 %v226
    %v1215 = vpop.f32.mrf.mxu0
    %v1216 = vadd.f32 %v154, %v1215
    %v1217 = vpop.f32.mrf.mxu0
    %v1218 = vadd.f32 %v158, %v1217
    %1219 = vmatprep.mubr.f32.mxu0 0.0
    %1220 = vmatmul.mubr.f32.gmra.mxu0 %v229
    %v1221 = vpop.f32.mrf.mxu0
    %v1222 = vadd.f32 %v154, %v1221
    %v1223 = vpop.f32.mrf.mxu0
    %v1224 = vadd.f32 %v158, %v1223
    %1225 = vmatprep.mubr.f32.mxu0 0.0
    %1226 = vmatmul.mubr.f32.gmra.mxu0 %v232
    %v1227 = vpop.f32.mrf.mxu0
    %v1228 = vadd.f32 %v154, %v1227
    %v1229 = vpop.f32.mrf.mxu0
    %v1230 = vadd.f32 %v158, %v1229
    %1231 = vmatprep.mubr.f32.mxu0 0.0
    %1232 = vmatmul.mubr.f32.gmra.mxu0 %v235
    %v1233 = vpop.f32.mrf.mxu0
    %v1234 = vadd.f32 %v154, %v1233
    %v1235 = vpop.f32.mrf.mxu0
    %v1236 = vadd.f32 %v158, %v1235
    %1237 = vmatprep.mubr.f32.mxu0 0.0
    %1238 = vmatmul.mubr.f32.gmra.mxu0 %v238
    %v1239 = vpop.f32.mrf.mxu0
    %v1240 = vadd.f32 %v154, %v1239
    %v1241 = vpop.f32.mrf.mxu0
    %v1242 = vadd.f32 %v158, %v1241
    %1243 = vmatprep.mubr.f32.mxu0 0.0
    %1244 = vmatmul.mubr.f32.gmra.mxu0 %v241
    %v1245 = vpop.f32.mrf.mxu0
    %v1246 = vadd.f32 %v154, %v1245
    %v1247 = vpop.f32.mrf.mxu0
    %v1248 = vadd.f32 %v158, %v1247
    %1249 = vmatprep.mubr.f32.mxu0 0.0
    %1250 = vmatmul.mubr.f32.gmra.mxu0 %v244
    %v1251 = vpop.f32.mrf.mxu0
    %v1252 = vadd.f32 %v154, %v1251
    %v1253 = vpop.f32.mrf.mxu0
    %v1254 = vadd.f32 %v158, %v1253
    %1255 = vmatprep.mubr.f32.mxu0 0.0
    %1256 = vmatmul.mubr.f32.gmra.mxu0 %v247
    %v1257 = vpop.f32.mrf.mxu0
    %v1258 = vadd.f32 %v154, %v1257
    %v1259 = vpop.f32.mrf.mxu0
    %v1260 = vadd.f32 %v158, %v1259
    %1261 = vmatprep.mubr.f32.mxu0 0.0
    %1262 = vmatmul.mubr.f32.gmra.mxu0 %v250
    %v1263 = vpop.f32.mrf.mxu0
    %v1264 = vadd.f32 %v154, %v1263
    %v1265 = vpop.f32.mrf.mxu0
    %v1266 = vadd.f32 %v158, %v1265
    %1267 = vmatprep.mubr.f32.mxu0 0.0
    %1268 = vmatmul.mubr.f32.gmra.mxu0 %v253
    %v1269 = vpop.f32.mrf.mxu0
    %v1270 = vadd.f32 %v154, %v1269
    %v1271 = vpop.f32.mrf.mxu0
    %v1272 = vadd.f32 %v158, %v1271
    %1273 = vmatprep.mubr.f32.mxu0 0.0
    %1274 = vmatmul.mubr.f32.gmra.mxu0 %v256
    %v1275 = vpop.f32.mrf.mxu0
    %v1276 = vadd.f32 %v154, %v1275
    %v1277 = vpop.f32.mrf.mxu0
    %v1278 = vadd.f32 %v158, %v1277
    %1279 = vmatprep.mubr.f32.mxu0 0.0
    %1280 = vmatmul.mubr.f32.gmra.mxu0 %v259
    %v1281 = vpop.f32.mrf.mxu0
    %v1282 = vadd.f32 %v154, %v1281
    %v1283 = vpop.f32.mrf.mxu0
    %v1284 = vadd.f32 %v158, %v1283
    %1285 = vmatprep.mubr.f32.mxu0 0.0
    %1286 = vmatmul.mubr.f32.gmra.mxu0 %v262
    %v1287 = vpop.f32.mrf.mxu0
    %v1288 = vadd.f32 %v154, %v1287
    %v1289 = vpop.f32.mrf.mxu0
    %v1290 = vadd.f32 %v158, %v1289
    %1291 = vdwg.mxu0
    %1292 = vst [vmem:[#allocation5] sm:$0xff] %v331
    %1293 = vst [vmem:[#allocation5 + $0x8] sm:$0xff] %v333
    %1294 = vst [vmem:[#allocation5 + $0x10] sm:$0xff] %v588
    %1295 = vst [vmem:[#allocation5 + $0x18] sm:$0xff] %v590
    %1296 = vst [vmem:[#allocation5 + $0x20] sm:$0xff] %v845
    %1297 = vst [vmem:[#allocation5 + $0x28] sm:$0xff] %v847
    %1298 = vst [vmem:[#allocation5 + $0x30] sm:$0xff] %v1102
    %1299 = vst [vmem:[#allocation5 + $0x38] sm:$0xff] %v1104
    %1300 = vst [vmem:[#allocation5 + $0x40] sm:$0xff] %v337
    %1301 = vst [vmem:[#allocation5 + $0x48] sm:$0xff] %v339
    %1302 = vst [vmem:[#allocation5 + $0x50] sm:$0xff] %v594
    %1303 = vst [vmem:[#allocation5 + $0x58] sm:$0xff] %v596
    %1304 = vst [vmem:[#allocation5 + $0x60] sm:$0xff] %v851
    %1305 = vst [vmem:[#allocation5 + $0x68] sm:$0xff] %v853
    %1306 = vst [vmem:[#allocation5 + $0x70] sm:$0xff] %v1108
    %1307 = vst [vmem:[#allocation5 + $0x78] sm:$0xff] %v1110
    %1308 = vst [vmem:[#allocation5 + $0x80] sm:$0xff] %v343
    %1309 = vst [vmem:[#allocation5 + $0x88] sm:$0xff] %v345
    %1310 = vst [vmem:[#allocation5 + $0x90] sm:$0xff] %v600
    %1311 = vst [vmem:[#allocation5 + $0x98] sm:$0xff] %v602
    %1312 = vst [vmem:[#allocation5 + $0xa0] sm:$0xff] %v857
    %1313 = vst [vmem:[#allocation5 + $0xa8] sm:$0xff] %v859
    %1314 = vst [vmem:[#allocation5 + $0xb0] sm:$0xff] %v1114
    %1315 = vst [vmem:[#allocation5 + $0xb8] sm:$0xff] %v1116
    %1316 = vst [vmem:[#allocation5 + $0xc0] sm:$0xff] %v349
    %1317 = vst [vmem:[#allocation5 + $0xc8] sm:$0xff] %v351
    %1318 = vst [vmem:[#allocation5 + $0xd0] sm:$0xff] %v606
    %1319 = vst [vmem:[#allocation5 + $0xd8] sm:$0xff] %v608
    %1320 = vst [vmem:[#allocation5 + $0xe0] sm:$0xff] %v863
    %1321 = vst [vmem:[#allocation5 + $0xe8] sm:$0xff] %v865
    %1322 = vst [vmem:[#allocation5 + $0xf0] sm:$0xff] %v1120
    %1323 = vst [vmem:[#allocation5 + $0xf8] sm:$0xff] %v1122
    %1324 = vst [vmem:[#allocation5 + $0x100] sm:$0xff] %v355
    %1325 = vst [vmem:[#allocation5 + $0x108] sm:$0xff] %v357
    %1326 = vst [vmem:[#allocation5 + $0x110] sm:$0xff] %v612
    %1327 = vst [vmem:[#allocation5 + $0x118] sm:$0xff] %v614
    %1328 = vst [vmem:[#allocation5 + $0x120] sm:$0xff] %v869
    %1329 = vst [vmem:[#allocation5 + $0x128] sm:$0xff] %v871
    %1330 = vst [vmem:[#allocation5 + $0x130] sm:$0xff] %v1126
    %1331 = vst [vmem:[#allocation5 + $0x138] sm:$0xff] %v1128
    %1332 = vst [vmem:[#allocation5 + $0x140] sm:$0xff] %v361
    %1333 = vst [vmem:[#allocation5 + $0x148] sm:$0xff] %v363
    %1334 = vst [vmem:[#allocation5 + $0x150] sm:$0xff] %v618
    %1335 = vst [vmem:[#allocation5 + $0x158] sm:$0xff] %v620
    %1336 = vst [vmem:[#allocation5 + $0x160] sm:$0xff] %v875
    %1337 = vst [vmem:[#allocation5 + $0x168] sm:$0xff] %v877
    %1338 = vst [vmem:[#allocation5 + $0x170] sm:$0xff] %v1132
    %1339 = vst [vmem:[#allocation5 + $0x178] sm:$0xff] %v1134
    %1340 = vst [vmem:[#allocation5 + $0x180] sm:$0xff] %v367
    %1341 = vst [vmem:[#allocation5 + $0x188] sm:$0xff] %v369
    %1342 = vst [vmem:[#allocation5 + $0x190] sm:$0xff] %v624
    %1343 = vst [vmem:[#allocation5 + $0x198] sm:$0xff] %v626
    %1344 = vst [vmem:[#allocation5 + $0x1a0] sm:$0xff] %v881
    %1345 = vst [vmem:[#allocation5 + $0x1a8] sm:$0xff] %v883
    %1346 = vst [vmem:[#allocation5 + $0x1b0] sm:$0xff] %v1138
    %1347 = vst [vmem:[#allocation5 + $0x1b8] sm:$0xff] %v1140
    %1348 = vst [vmem:[#allocation5 + $0x1c0] sm:$0xff] %v373
    %1349 = vst [vmem:[#allocation5 + $0x1c8] sm:$0xff] %v375
    %1350 = vst [vmem:[#allocation5 + $0x1d0] sm:$0xff] %v630
    %1351 = vst [vmem:[#allocation5 + $0x1d8] sm:$0xff] %v632
    %1352 = vst [vmem:[#allocation5 + $0x1e0] sm:$0xff] %v887
    %1353 = vst [vmem:[#allocation5 + $0x1e8] sm:$0xff] %v889
    %1354 = vst [vmem:[#allocation5 + $0x1f0] sm:$0xff] %v1144
    %1355 = vst [vmem:[#allocation5 + $0x1f8] sm:$0xff] %v1146
    %1356 = vst [vmem:[#allocation5 + $0x200] sm:$0xff] %v379
    %1357 = vst [vmem:[#allocation5 + $0x208] sm:$0xff] %v381
    %1358 = vst [vmem:[#allocation5 + $0x210] sm:$0xff] %v636
    %1359 = vst [vmem:[#allocation5 + $0x218] sm:$0xff] %v638
    %1360 = vst [vmem:[#allocation5 + $0x220] sm:$0xff] %v893
    %1361 = vst [vmem:[#allocation5 + $0x228] sm:$0xff] %v895
    %1362 = vst [vmem:[#allocation5 + $0x230] sm:$0xff] %v1150
    %1363 = vst [vmem:[#allocation5 + $0x238] sm:$0xff] %v1152
    %1364 = vst [vmem:[#allocation5 + $0x240] sm:$0xff] %v385
    %1365 = vst [vmem:[#allocation5 + $0x248] sm:$0xff] %v387
    %1366 = vst [vmem:[#allocation5 + $0x250] sm:$0xff] %v642
    %1367 = vst [vmem:[#allocation5 + $0x258] sm:$0xff] %v644
    %1368 = vst [vmem:[#allocation5 + $0x260] sm:$0xff] %v899
    %1369 = vst [vmem:[#allocation5 + $0x268] sm:$0xff] %v901
    %1370 = vst [vmem:[#allocation5 + $0x270] sm:$0xff] %v1156
    %1371 = vst [vmem:[#allocation5 + $0x278] sm:$0xff] %v1158
    %1372 = vst [vmem:[#allocation5 + $0x280] sm:$0xff] %v391
    %1373 = vst [vmem:[#allocation5 + $0x288] sm:$0xff] %v393
    %1374 = vst [vmem:[#allocation5 + $0x290] sm:$0xff] %v648
    %1375 = vst [vmem:[#allocation5 + $0x298] sm:$0xff] %v650
    %1376 = vst [vmem:[#allocation5 + $0x2a0] sm:$0xff] %v905
    %1377 = vst [vmem:[#allocation5 + $0x2a8] sm:$0xff] %v907
    %1378 = vst [vmem:[#allocation5 + $0x2b0] sm:$0xff] %v1162
    %1379 = vst [vmem:[#allocation5 + $0x2b8] sm:$0xff] %v1164
    %1380 = vst [vmem:[#allocation5 + $0x2c0] sm:$0xff] %v397
    %1381 = vst [vmem:[#allocation5 + $0x2c8] sm:$0xff] %v399
    %1382 = vst [vmem:[#allocation5 + $0x2d0] sm:$0xff] %v654
    %1383 = vst [vmem:[#allocation5 + $0x2d8] sm:$0xff] %v656
    %1384 = vst [vmem:[#allocation5 + $0x2e0] sm:$0xff] %v911
    %1385 = vst [vmem:[#allocation5 + $0x2e8] sm:$0xff] %v913
    %1386 = vst [vmem:[#allocation5 + $0x2f0] sm:$0xff] %v1168
    %1387 = vst [vmem:[#allocation5 + $0x2f8] sm:$0xff] %v1170
    %1388 = vst [vmem:[#allocation5 + $0x300] sm:$0xff] %v403
    %1389 = vst [vmem:[#allocation5 + $0x308] sm:$0xff] %v405
    %1390 = vst [vmem:[#allocation5 + $0x310] sm:$0xff] %v660
    %1391 = vst [vmem:[#allocation5 + $0x318] sm:$0xff] %v662
    %1392 = vst [vmem:[#allocation5 + $0x320] sm:$0xff] %v917
    %1393 = vst [vmem:[#allocation5 + $0x328] sm:$0xff] %v919
    %1394 = vst [vmem:[#allocation5 + $0x330] sm:$0xff] %v1174
    %1395 = vst [vmem:[#allocation5 + $0x338] sm:$0xff] %v1176
    %1396 = vst [vmem:[#allocation5 + $0x340] sm:$0xff] %v409
    %1397 = vst [vmem:[#allocation5 + $0x348] sm:$0xff] %v411
    %1398 = vst [vmem:[#allocation5 + $0x350] sm:$0xff] %v666
    %1399 = vst [vmem:[#allocation5 + $0x358] sm:$0xff] %v668
    %1400 = vst [vmem:[#allocation5 + $0x360] sm:$0xff] %v923
    %1401 = vst [vmem:[#allocation5 + $0x368] sm:$0xff] %v925
    %1402 = vst [vmem:[#allocation5 + $0x370] sm:$0xff] %v1180
    %1403 = vst [vmem:[#allocation5 + $0x378] sm:$0xff] %v1182
    %1404 = vst [vmem:[#allocation5 + $0x380] sm:$0xff] %v415
    %1405 = vst [vmem:[#allocation5 + $0x388] sm:$0xff] %v417
    %1406 = vst [vmem:[#allocation5 + $0x390] sm:$0xff] %v672
    %1407 = vst [vmem:[#allocation5 + $0x398] sm:$0xff] %v674
    %1408 = vst [vmem:[#allocation5 + $0x3a0] sm:$0xff] %v929
    %1409 = vst [vmem:[#allocation5 + $0x3a8] sm:$0xff] %v931
    %1410 = vst [vmem:[#allocation5 + $0x3b0] sm:$0xff] %v1186
    %1411 = vst [vmem:[#allocation5 + $0x3b8] sm:$0xff] %v1188
    %1412 = vst [vmem:[#allocation5 + $0x3c0] sm:$0xff] %v421
    %1413 = vst [vmem:[#allocation5 + $0x3c8] sm:$0xff] %v423
    %1414 = vst [vmem:[#allocation5 + $0x3d0] sm:$0xff] %v678
    %1415 = vst [vmem:[#allocation5 + $0x3d8] sm:$0xff] %v680
    %1416 = vst [vmem:[#allocation5 + $0x3e0] sm:$0xff] %v935
    %1417 = vst [vmem:[#allocation5 + $0x3e8] sm:$0xff] %v937
    %1418 = vst [vmem:[#allocation5 + $0x3f0] sm:$0xff] %v1192
    %1419 = vst [vmem:[#allocation5 + $0x3f8] sm:$0xff] %v1194
    %1420 = vst [vmem:[#allocation5 + $0x400] sm:$0xff] %v427
    %1421 = vst [vmem:[#allocation5 + $0x408] sm:$0xff] %v429
    %1422 = vst [vmem:[#allocation5 + $0x410] sm:$0xff] %v684
    %1423 = vst [vmem:[#allocation5 + $0x418] sm:$0xff] %v686
    %1424 = vst [vmem:[#allocation5 + $0x420] sm:$0xff] %v941
    %1425 = vst [vmem:[#allocation5 + $0x428] sm:$0xff] %v943
    %1426 = vst [vmem:[#allocation5 + $0x430] sm:$0xff] %v1198
    %1427 = vst [vmem:[#allocation5 + $0x438] sm:$0xff] %v1200
    %1428 = vst [vmem:[#allocation5 + $0x440] sm:$0xff] %v433
    %1429 = vst [vmem:[#allocation5 + $0x448] sm:$0xff] %v435
    %1430 = vst [vmem:[#allocation5 + $0x450] sm:$0xff] %v690
    %1431 = vst [vmem:[#allocation5 + $0x458] sm:$0xff] %v692
    %1432 = vst [vmem:[#allocation5 + $0x460] sm:$0xff] %v947
    %1433 = vst [vmem:[#allocation5 + $0x468] sm:$0xff] %v949
    %1434 = vst [vmem:[#allocation5 + $0x470] sm:$0xff] %v1204
    %1435 = vst [vmem:[#allocation5 + $0x478] sm:$0xff] %v1206
    %1436 = vst [vmem:[#allocation5 + $0x480] sm:$0xff] %v439
    %1437 = vst [vmem:[#allocation5 + $0x488] sm:$0xff] %v441
    %1438 = vst [vmem:[#allocation5 + $0x490] sm:$0xff] %v696
    %1439 = vst [vmem:[#allocation5 + $0x498] sm:$0xff] %v698
    %1440 = vst [vmem:[#allocation5 + $0x4a0] sm:$0xff] %v953
    %1441 = vst [vmem:[#allocation5 + $0x4a8] sm:$0xff] %v955
    %1442 = vst [vmem:[#allocation5 + $0x4b0] sm:$0xff] %v1210
    %1443 = vst [vmem:[#allocation5 + $0x4b8] sm:$0xff] %v1212
    %1444 = vst [vmem:[#allocation5 + $0x4c0] sm:$0xff] %v445
    %1445 = vst [vmem:[#allocation5 + $0x4c8] sm:$0xff] %v447
    %1446 = vst [vmem:[#allocation5 + $0x4d0] sm:$0xff] %v702
    %1447 = vst [vmem:[#allocation5 + $0x4d8] sm:$0xff] %v704
    %1448 = vst [vmem:[#allocation5 + $0x4e0] sm:$0xff] %v959
    %1449 = vst [vmem:[#allocation5 + $0x4e8] sm:$0xff] %v961
    %1450 = vst [vmem:[#allocation5 + $0x4f0] sm:$0xff] %v1216
    %1451 = vst [vmem:[#allocation5 + $0x4f8] sm:$0xff] %v1218
    %1452 = vst [vmem:[#allocation5 + $0x500] sm:$0xff] %v451
    %1453 = vst [vmem:[#allocation5 + $0x508] sm:$0xff] %v453
    %1454 = vst [vmem:[#allocation5 + $0x510] sm:$0xff] %v708
    %1455 = vst [vmem:[#allocation5 + $0x518] sm:$0xff] %v710
    %1456 = vst [vmem:[#allocation5 + $0x520] sm:$0xff] %v965
    %1457 = vst [vmem:[#allocation5 + $0x528] sm:$0xff] %v967
    %1458 = vst [vmem:[#allocation5 + $0x530] sm:$0xff] %v1222
    %1459 = vst [vmem:[#allocation5 + $0x538] sm:$0xff] %v1224
    %1460 = vst [vmem:[#allocation5 + $0x540] sm:$0xff] %v457
    %1461 = vst [vmem:[#allocation5 + $0x548] sm:$0xff] %v459
    %1462 = vst [vmem:[#allocation5 + $0x550] sm:$0xff] %v714
    %1463 = vst [vmem:[#allocation5 + $0x558] sm:$0xff] %v716
    %1464 = vst [vmem:[#allocation5 + $0x560] sm:$0xff] %v971
    %1465 = vst [vmem:[#allocation5 + $0x568] sm:$0xff] %v973
    %1466 = vst [vmem:[#allocation5 + $0x570] sm:$0xff] %v1228
    %1467 = vst [vmem:[#allocation5 + $0x578] sm:$0xff] %v1230
    %1468 = vst [vmem:[#allocation5 + $0x580] sm:$0xff] %v463
    %1469 = vst [vmem:[#allocation5 + $0x588] sm:$0xff] %v465
    %1470 = vst [vmem:[#allocation5 + $0x590] sm:$0xff] %v720
    %1471 = vst [vmem:[#allocation5 + $0x598] sm:$0xff] %v722
    %1472 = vst [vmem:[#allocation5 + $0x5a0] sm:$0xff] %v977
    %1473 = vst [vmem:[#allocation5 + $0x5a8] sm:$0xff] %v979
    %1474 = vst [vmem:[#allocation5 + $0x5b0] sm:$0xff] %v1234
    %1475 = vst [vmem:[#allocation5 + $0x5b8] sm:$0xff] %v1236
    %1476 = vst [vmem:[#allocation5 + $0x5c0] sm:$0xff] %v469
    %1477 = vst [vmem:[#allocation5 + $0x5c8] sm:$0xff] %v471
    %1478 = vst [vmem:[#allocation5 + $0x5d0] sm:$0xff] %v726
    %1479 = vst [vmem:[#allocation5 + $0x5d8] sm:$0xff] %v728
    %1480 = vst [vmem:[#allocation5 + $0x5e0] sm:$0xff] %v983
    %1481 = vst [vmem:[#allocation5 + $0x5e8] sm:$0xff] %v985
    %1482 = vst [vmem:[#allocation5 + $0x5f0] sm:$0xff] %v1240
    %1483 = vst [vmem:[#allocation5 + $0x5f8] sm:$0xff] %v1242
    %1484 = vst [vmem:[#allocation5 + $0x600] sm:$0xff] %v475
    %1485 = vst [vmem:[#allocation5 + $0x608] sm:$0xff] %v477
    %1486 = vst [vmem:[#allocation5 + $0x610] sm:$0xff] %v732
    %1487 = vst [vmem:[#allocation5 + $0x618] sm:$0xff] %v734
    %1488 = vst [vmem:[#allocation5 + $0x620] sm:$0xff] %v989
    %1489 = vst [vmem:[#allocation5 + $0x628] sm:$0xff] %v991
    %1490 = vst [vmem:[#allocation5 + $0x630] sm:$0xff] %v1246
    %1491 = vst [vmem:[#allocation5 + $0x638] sm:$0xff] %v1248
    %1492 = vst [vmem:[#allocation5 + $0x640] sm:$0xff] %v481
    %1493 = vst [vmem:[#allocation5 + $0x648] sm:$0xff] %v483
    %1494 = vst [vmem:[#allocation5 + $0x650] sm:$0xff] %v738
    %1495 = vst [vmem:[#allocation5 + $0x658] sm:$0xff] %v740
    %1496 = vst [vmem:[#allocation5 + $0x660] sm:$0xff] %v995
    %1497 = vst [vmem:[#allocation5 + $0x668] sm:$0xff] %v997
    %1498 = vst [vmem:[#allocation5 + $0x670] sm:$0xff] %v1252
    %1499 = vst [vmem:[#allocation5 + $0x678] sm:$0xff] %v1254
    %1500 = vst [vmem:[#allocation5 + $0x680] sm:$0xff] %v487
    %1501 = vst [vmem:[#allocation5 + $0x688] sm:$0xff] %v489
    %1502 = vst [vmem:[#allocation5 + $0x690] sm:$0xff] %v744
    %1503 = vst [vmem:[#allocation5 + $0x698] sm:$0xff] %v746
    %1504 = vst [vmem:[#allocation5 + $0x6a0] sm:$0xff] %v1001
    %1505 = vst [vmem:[#allocation5 + $0x6a8] sm:$0xff] %v1003
    %1506 = vst [vmem:[#allocation5 + $0x6b0] sm:$0xff] %v1258
    %1507 = vst [vmem:[#allocation5 + $0x6b8] sm:$0xff] %v1260
    %1508 = vst [vmem:[#allocation5 + $0x6c0] sm:$0xff] %v493
    %1509 = vst [vmem:[#allocation5 + $0x6c8] sm:$0xff] %v495
    %1510 = vst [vmem:[#allocation5 + $0x6d0] sm:$0xff] %v750
    %1511 = vst [vmem:[#allocation5 + $0x6d8] sm:$0xff] %v752
    %1512 = vst [vmem:[#allocation5 + $0x6e0] sm:$0xff] %v1007
    %1513 = vst [vmem:[#allocation5 + $0x6e8] sm:$0xff] %v1009
    %1514 = vst [vmem:[#allocation5 + $0x6f0] sm:$0xff] %v1264
    %1515 = vst [vmem:[#allocation5 + $0x6f8] sm:$0xff] %v1266
    %1516 = vst [vmem:[#allocation5 + $0x700] sm:$0xff] %v499
    %1517 = vst [vmem:[#allocation5 + $0x708] sm:$0xff] %v501
    %1518 = vst [vmem:[#allocation5 + $0x710] sm:$0xff] %v756
    %1519 = vst [vmem:[#allocation5 + $0x718] sm:$0xff] %v758
    %1520 = vst [vmem:[#allocation5 + $0x720] sm:$0xff] %v1013
    %1521 = vst [vmem:[#allocation5 + $0x728] sm:$0xff] %v1015
    %1522 = vst [vmem:[#allocation5 + $0x730] sm:$0xff] %v1270
    %1523 = vst [vmem:[#allocation5 + $0x738] sm:$0xff] %v1272
    %1524 = vst [vmem:[#allocation5 + $0x740] sm:$0xff] %v505
    %1525 = vst [vmem:[#allocation5 + $0x748] sm:$0xff] %v507
    %1526 = vst [vmem:[#allocation5 + $0x750] sm:$0xff] %v762
    %1527 = vst [vmem:[#allocation5 + $0x758] sm:$0xff] %v764
    %1528 = vst [vmem:[#allocation5 + $0x760] sm:$0xff] %v1019
    %1529 = vst [vmem:[#allocation5 + $0x768] sm:$0xff] %v1021
    %1530 = vst [vmem:[#allocation5 + $0x770] sm:$0xff] %v1276
    %1531 = vst [vmem:[#allocation5 + $0x778] sm:$0xff] %v1278
    %1532 = vst [vmem:[#allocation5 + $0x780] sm:$0xff] %v511
    %1533 = vst [vmem:[#allocation5 + $0x788] sm:$0xff] %v513
    %1534 = vst [vmem:[#allocation5 + $0x790] sm:$0xff] %v768
    %1535 = vst [vmem:[#allocation5 + $0x798] sm:$0xff] %v770
    %1536 = vst [vmem:[#allocation5 + $0x7a0] sm:$0xff] %v1025
    %1537 = vst [vmem:[#allocation5 + $0x7a8] sm:$0xff] %v1027
    %1538 = vst [vmem:[#allocation5 + $0x7b0] sm:$0xff] %v1282
    %1539 = vst [vmem:[#allocation5 + $0x7b8] sm:$0xff] %v1284
    %1540 = vst [vmem:[#allocation5 + $0x7c0] sm:$0xff] %v517
    %1541 = vst [vmem:[#allocation5 + $0x7c8] sm:$0xff] %v519
    %1542 = vst [vmem:[#allocation5 + $0x7d0] sm:$0xff] %v774
    %1543 = vst [vmem:[#allocation5 + $0x7d8] sm:$0xff] %v776
    %1544 = vst [vmem:[#allocation5 + $0x7e0] sm:$0xff] %v1031
    %1545 = vst [vmem:[#allocation5 + $0x7e8] sm:$0xff] %v1033
    %1546 = vst [vmem:[#allocation5 + $0x7f0] sm:$0xff] %v1288
    %1547 = vst [vmem:[#allocation5 + $0x7f8] sm:$0xff] %v1290
    // Predicated region
    $region18: #{tpu_custom_call.1} parent=1 // pred_check
      _
    $region19: #{tpu_custom_call.1} parent=1 // pred_check_branch
      %1549 = sbr.rel (0) target = $region21
    $region20: #{tpu_custom_call.1} parent=1 // pred_region
      %s1551 = ssub.s32 32768, 32768
      %1552 = vsyncadd [#allocation4], %s1551
      %s1553 = sshll.u32 [#allocation5], 4
      %s1554 = int_to_ptr.vmem [resolvable:$true] %s1553
      %1559 = dma.vmem_to_hbm [thread:$0]  %s1554, 32768, %s3, [#allocation4], 1024, 1024, 64
    $region21: #{tpu_custom_call.1} parent=1 // pred_fallthru
      _
    // Predicated region
    $region22: #{tpu_custom_call.1} parent=1 // pred_check
      _
    $region23: #{tpu_custom_call.1} parent=1 // pred_check_branch
      %1561 = sbr.rel (0) target = $region25
    $region24: #{tpu_custom_call.1} parent=1 // pred_region
      %1562 = dma.done [#allocation4], 32768
    $region25: #{tpu_custom_call.1} parent=1 // pred_fallthru
      _
    %1563 = vsyncpa [#allocation3], 1
    %1564 = vsyncpa [#allocation4], 1

</llo_original>
